<compile_context>
chip_gen: v7x
topology: tpu7x:2x2x1
jax: 0.10.0
libtpu: 0.0.40
codegen_flags: <defaults>
</compile_context>

<pallas_src>
import functools

import jax
import jax.numpy as jnp
from jax.experimental import pallas as pl
from jax.experimental.pallas import tpu as pltpu


def _round_up(x, m):
    return (x + m - 1) // m * m


def _cdiv(a, b):
    return -(-a // b)


# ---------------------------------------------------------------------------
# Kernel 1 (fused): stem conv (as matmul) -> 1x1 projection -> global sum pool
#   grid = (B, 2 halves, n_half spatial tiles); pooled sum kept in VMEM scratch
# ---------------------------------------------------------------------------
def _feat_pool_kernel(patch_ref, sw_ref, sb_ref, pw_ref, pb_ref, out_ref,
                      xpad_ref, acc_ref, *, ts, n_half, s_actual):
    h = pl.program_id(1)
    s = pl.program_id(2)

    @pl.when(s == 0)
    def _():
        acc_ref[...] = jnp.zeros_like(acc_ref)
        # lanes 9..127 are only written here; they stay exactly 0 afterwards
        xpad_ref[...] = jnp.zeros_like(xpad_ref)

    # im2col tile (TS, 9) -> lane-padded VMEM slab (TS, 128); padded lanes stay 0
    xpad_ref[:, 0:9] = patch_ref[...]

    # stem conv + folded BN + ReLU  (padded weight rows/cols keep extra lanes 0)
    stem = jnp.dot(xpad_ref[...].astype(jnp.bfloat16), sw_ref[...],
                   preferred_element_type=jnp.float32)
    stem = jnp.maximum(stem + sb_ref[...], 0.0)                    # (TS, 128) f32
    # stand-in 1x1 projection -> 2048 + ReLU (padded K rows are 0)
    proj = jnp.dot(stem.astype(jnp.bfloat16), pw_ref[...],
                   preferred_element_type=jnp.float32)
    proj = jnp.maximum(proj + pb_ref[...], 0.0)                    # (TS, 2048) f32

    tile_start = (h * n_half + s) * ts
    needs_mask = tile_start + ts > s_actual          # only the last real tile(s)

    @pl.when(jnp.logical_not(needs_mask))
    def _():  # fast path: every row valid, plain row-sum
        acc_ref[...] += jnp.sum(proj, axis=0, keepdims=True)

    @pl.when(needs_mask)
    def _():  # tile contains zero-padded spatial rows -> mask their relu(bias) term
        row = jax.lax.broadcasted_iota(jnp.int32, (ts, 1), 0) + tile_start
        valid = (row < s_actual).astype(jnp.float32)
        acc_ref[...] += jnp.sum(proj * valid, axis=0, keepdims=True)

    @pl.when(s == pl.num_programs(2) - 1)
    def _():
        out_ref[...] = jnp.broadcast_to(acc_ref[...], out_ref.shape)


def feat_pool_call(patches, stem_w, stem_b, proj_w, proj_b, *, s_actual, ts, n_half):
    B, s_pad, K = patches.shape                                    # K == 9 (unpadded)
    assert s_pad == 2 * n_half * ts
    kernel = functools.partial(_feat_pool_kernel, ts=ts, n_half=n_half,
                               s_actual=s_actual)
    out = pl.pallas_call(
        kernel,
        out_shape=jax.ShapeDtypeStruct((B, 2, 8, 2048), jnp.float32),
        grid=(B, 2, n_half),
        in_specs=[
            pl.BlockSpec((None, ts, K), lambda b, h, s: (b, h * n_half + s, 0)),
            pl.BlockSpec((128, 128), lambda b, h, s: (0, 0)),      # stem weight (padded)
            pl.BlockSpec((1, 128), lambda b, h, s: (0, 0)),        # stem bias  (padded)
            pl.BlockSpec((128, 2048), lambda b, h, s: (0, 0)),     # proj weight (padded)
            pl.BlockSpec((1, 2048), lambda b, h, s: (0, 0)),       # proj bias
        ],
        out_specs=pl.BlockSpec((None, None, 8, 2048), lambda b, h, s: (b, h, 0, 0)),
        scratch_shapes=[
            pltpu.VMEM((ts, 128), jnp.float32),                    # lane-padded patch slab
            pltpu.VMEM((1, 2048), jnp.float32),                    # pooled-sum accumulator
        ],
        compiler_params=pltpu.CompilerParams(
            dimension_semantics=("parallel", "parallel", "arbitrary"),
            vmem_limit_bytes=48 << 20),
    )(patches, stem_w, stem_b, proj_w, proj_b)
    return out[:, :, 0, :]                                         # (B, 2, 2048) partial sums


# ---------------------------------------------------------------------------
# Kernel 2 (fused head):
#   view + cat([feat, gender]) + fc1 + relu + fc2 + relu + head
#   (Dropout(0.5) layers are identity in eval mode.)
# ---------------------------------------------------------------------------
def _head_kernel(feat_ref, gender_ref, w1f_ref, w1g_ref, b1_ref,
                 w2_ref, b2_ref, wh_ref, bh_ref, o_ref):
    feat = feat_ref[...].astype(jnp.bfloat16)                      # (B, 2048)
    h1 = jnp.dot(feat, w1f_ref[...], preferred_element_type=jnp.float32)
    h1 = h1 + gender_ref[...] * w1g_ref[...]                       # gender column of fc1 (== concat)
    h1 = jnp.maximum(h1 + b1_ref[...], 0.0)                        # relu1 (drop1 = identity)
    h2 = jnp.dot(h1.astype(jnp.bfloat16), w2_ref[...],
                 preferred_element_type=jnp.float32)
    h2 = jnp.maximum(h2 + b2_ref[...], 0.0)                        # relu2 (drop2 = identity)
    out = jnp.sum(h2 * wh_ref[...], axis=-1, keepdims=True) + bh_ref[...]   # head: 1024 -> 1
    o_ref[...] = out.astype(o_ref.dtype)


def head_call(pooled, gender, p):
    B, C = pooled.shape
    return pl.pallas_call(
        _head_kernel,
        out_shape=jax.ShapeDtypeStruct((B, 1), jnp.float32),
        grid=(1,),
        in_specs=[
            pl.BlockSpec((B, C), lambda i: (0, 0)),
            pl.BlockSpec((B, 1), lambda i: (0, 0)),
            pl.BlockSpec((C, 1024), lambda i: (0, 0)),
            pl.BlockSpec((1, 1024), lambda i: (0, 0)),
            pl.BlockSpec((1, 1024), lambda i: (0, 0)),
            pl.BlockSpec((1024, 1024), lambda i: (0, 0)),
            pl.BlockSpec((1, 1024), lambda i: (0, 0)),
            pl.BlockSpec((1, 1024), lambda i: (0, 0)),
            pl.BlockSpec((1, 1), lambda i: (0, 0)),
        ],
        out_specs=pl.BlockSpec((B, 1), lambda i: (0, 0)),
        compiler_params=pltpu.CompilerParams(vmem_limit_bytes=48 << 20),
    )(pooled, gender, p["w1_feat"], p["w1_gender"], p["b1"],
      p["w2"], p["b2"], p["wh"], p["bh"])


# ---------------------------------------------------------------------------
# Glue: im2col for the 3x3 stride-2 valid conv (layout transform only, stays 9-wide)
# ---------------------------------------------------------------------------
def im2col_3x3_s2(x_nhwc):
    B, H, W, C = x_nhwc.shape
    OH = (H - 3) // 2 + 1
    OW = (W - 3) // 2 + 1
    cols = []
    for kh in range(3):
        for kw in range(3):
            cols.append(x_nhwc[:, kh:kh + 2 * OH:2, kw:kw + 2 * OW:2, :])
    p = jnp.stack(cols, axis=3)                    # (B, OH, OW, 9, C)
    return p.reshape(B, OH * OW, 9 * C), (OH, OW)


# ---------------------------------------------------------------------------
# Deterministic synthetic parameters (shapes follow the module's __init__);
# zero-padded to lane-dense sizes, MXU weights stored in bf16.
# ---------------------------------------------------------------------------
def init_params(key):
    ks = jax.random.split(key, 8)

    def nrm(k, shape, fan_in):
        return jax.random.normal(k, shape, jnp.float32) / jnp.sqrt(float(fan_in))

    # Conv2d_1a_3x3: 3x3 conv (3 -> 32) stride 2 + BatchNorm (eps=1e-3) folded.
    # BAA_Model repeats the grayscale input to 3 identical channels; a conv over
    # identical channels equals a conv whose weight is summed over cin.
    conv_w = nrm(ks[0], (3, 3, 3, 32), 27.0)
    bn_gamma = jnp.ones((32,), jnp.float32)
    bn_beta = jnp.zeros((32,), jnp.float32)
    bn_mean = jnp.zeros((32,), jnp.float32)
    bn_var = jnp.ones((32,), jnp.float32)
    scale = bn_gamma / jnp.sqrt(bn_var + 1e-3)
    stem_w = (conv_w * scale).sum(axis=2).reshape(9, 32)           # (kh*kw, cout)
    stem_b = bn_beta - bn_mean * scale
    # zero-pad to lane-dense MXU operands (extra rows/cols only ever multiply zeros)
    stem_w_p = jnp.zeros((128, 128), jnp.float32).at[:9, :32].set(stem_w)
    stem_b_p = jnp.zeros((1, 128), jnp.float32).at[:, :32].set(stem_b)

    # stand-in 1x1 projection 32 -> 2048 (see TODO in header), rows 32..127 zero
    proj_w = nrm(ks[1], (32, 2048), 32.0)
    proj_w_p = jnp.zeros((128, 2048), jnp.float32).at[:32, :].set(proj_w)
    proj_b = jnp.zeros((1, 2048), jnp.float32)

    # fc1: Linear(2048 + 1, 1024) stored (in, out); split feat / gender columns (== concat)
    w1 = nrm(ks[2], (2049, 1024), 2049.0)
    return dict(
        stem_w=stem_w_p.astype(jnp.bfloat16),
        stem_b=stem_b_p,
        proj_w=proj_w_p.astype(jnp.bfloat16),
        proj_b=proj_b,
        w1_feat=w1[:2048, :].astype(jnp.bfloat16),                 # (2048, 1024)
        w1_gender=w1[2048:2049, :],                                # (1, 1024)
        b1=nrm(ks[3], (1, 1024), 2049.0),
        w2=nrm(ks[4], (1024, 1024), 1024.0).astype(jnp.bfloat16),  # fc2
        b2=nrm(ks[5], (1, 1024), 1024.0),
        wh=nrm(ks[6], (1, 1024), 1024.0),                          # head: Linear(1024, 1)
        bh=nrm(ks[7], (1, 1), 1024.0),
    )


# ---------------------------------------------------------------------------
# Forward pass
# ---------------------------------------------------------------------------
def baa_forward(params, x, gender):
    # x: (B, 1, H, W) NCHW grayscale; gender: (B, 1)
    x = jnp.transpose(x, (0, 2, 3, 1)).astype(jnp.float32)         # -> NHWC
    patches, (OH, OW) = im2col_3x3_s2(x)                           # (B, S, 9) f32, no lane padding
    B, S, K = patches.shape
    assert K == 9

    # spatial tile: up to 1024 rows (v7x 64-MiB-VMEM safe), rounded-to-8 fallback for tiny S;
    # the reduction is split into 2 halves so v7x can use both TensorCores at small batch.
    ts = min(1024, _round_up(max(_cdiv(S, 2), 8), 8))
    n_half = _cdiv(S, 2 * ts)
    s_pad = 2 * n_half * ts
    patches = jnp.pad(patches, ((0, 0), (0, s_pad - S), (0, 0)))   # pad spatial rows only

    partial = feat_pool_call(patches, params["stem_w"], params["stem_b"],
                             params["proj_w"], params["proj_b"],
                             s_actual=S, ts=ts, n_half=n_half)     # (B, 2, 2048) sums
    pooled = partial.sum(axis=1) * (1.0 / float(S))                # AdaptiveAvgPool2d(1)
    return head_call(pooled, gender.astype(jnp.float32), params)   # (B, 1)


if __name__ == "__main__":
    key = jax.random.PRNGKey(0)
    pkey, xkey, gkey = jax.random.split(key, 3)
    params = init_params(pkey)

    x = jax.random.normal(xkey, (2, 1, 16, 16), jnp.float32)       # small grayscale input
    gender = (jax.random.uniform(gkey, (2, 1)) > 0.5).astype(jnp.float32)

    out = baa_forward(params, x, gender)
    out = jax.block_until_ready(out)
    assert out.shape == (2, 1) and out.dtype == jnp.float32
    print("KERNEL_OK")
</pallas_src>

<mosaic_0001>
module attributes {stable_mosaic.version = 11 : i64} {
  func.func @_feat_pool_kernel(%arg0: i32, %arg1: i32, %arg2: i32, %arg3: memref<1x32x9xf32, #tpu.memory_space<vmem>>, %arg4: memref<128x128xbf16, #tpu.memory_space<vmem>>, %arg5: memref<1x128xf32, #tpu.memory_space<vmem>>, %arg6: memref<128x2048xbf16, #tpu.memory_space<vmem>>, %arg7: memref<1x2048xf32, #tpu.memory_space<vmem>>, %arg8: memref<1x1x8x2048xf32, #tpu.memory_space<vmem>>, %arg9: memref<32x128xf32, #tpu.memory_space<vmem>>, %arg10: memref<1x2048xf32, #tpu.memory_space<vmem>>) attributes {dimension_semantics = [#tpu.dimension_semantics<parallel>, #tpu.dimension_semantics<parallel>, #tpu.dimension_semantics<arbitrary>], iteration_bounds = array<i64: 2, 2, 1>, scalar_prefetch = 0 : i64, scratch_operands = 2 : i64, tpu.core_type = #tpu.core_type<tc>, window_params = [{transform_indices = @transform_0, window_bounds = array<i64: 1, 32, 9>}, {pipeline_mode = #tpu.pipeline_mode<synchronous>, transform_indices = @transform_1, window_bounds = array<i64: 128, 128>}, {pipeline_mode = #tpu.pipeline_mode<synchronous>, transform_indices = @transform_2, window_bounds = array<i64: 1, 128>}, {pipeline_mode = #tpu.pipeline_mode<synchronous>, transform_indices = @transform_3, window_bounds = array<i64: 128, 2048>}, {pipeline_mode = #tpu.pipeline_mode<synchronous>, transform_indices = @transform_4, window_bounds = array<i64: 1, 2048>}, {transform_indices = @transform_5, window_bounds = array<i64: 1, 1, 8, 2048>}]} {
    %c0_i32 = arith.constant 0 : i32
    %0 = arith.cmpi eq, %arg2, %c0_i32 : i32
    %1 = arith.extui %0 : i1 to i32
    %c0_i32_0 = arith.constant 0 : i32
    %2 = arith.cmpi ne, %1, %c0_i32_0 : i32
    scf.if %2 {
      %cst_23 = arith.constant 0.000000e+00 : f32
      %36 = vector.broadcast %cst_23 : f32 to vector<1x2048xf32>
      %c0_24 = arith.constant 0 : index
      %c0_25 = arith.constant 0 : index
      %37 = vector.load %arg10[%c0_24, %c0_25] : memref<1x2048xf32, #tpu.memory_space<vmem>>, vector<1x2048xf32>
      tpu.vector_store %arg10[%c0_24, %c0_25], %36 {strides = array<i32>} : memref<1x2048xf32, #tpu.memory_space<vmem>>, vector<1x2048xf32>,
      %cst_26 = arith.constant 0.000000e+00 : f32
      %38 = vector.broadcast %cst_26 : f32 to vector<32x128xf32>
      %c0_27 = arith.constant 0 : index
      %c0_28 = arith.constant 0 : index
      %39 = vector.load %arg9[%c0_27, %c0_28] : memref<32x128xf32, #tpu.memory_space<vmem>>, vector<32x128xf32>
      tpu.vector_store %arg9[%c0_27, %c0_28], %38 {strides = array<i32>} : memref<32x128xf32, #tpu.memory_space<vmem>>, vector<32x128xf32>,
    } else {
    }
    %c0 = arith.constant 0 : index
    %c0_1 = arith.constant 0 : index
    %c0_2 = arith.constant 0 : index
    %3 = vector.load %arg3[%c0, %c0_1, %c0_2] : memref<1x32x9xf32, #tpu.memory_space<vmem>>, vector<1x32x9xf32>
    %4 = vector.shape_cast %3 : vector<1x32x9xf32> to vector<32x9xf32>
    %c0_3 = arith.constant 0 : index
    %c0_4 = arith.constant 0 : index
    %5 = vector.load %arg9[%c0_3, %c0_4] : memref<32x128xf32, #tpu.memory_space<vmem>>, vector<32x9xf32>
    tpu.vector_store %arg9[%c0_3, %c0_4], %4 {strides = array<i32>} : memref<32x128xf32, #tpu.memory_space<vmem>>, vector<32x9xf32>,
    %c0_5 = arith.constant 0 : index
    %c0_6 = arith.constant 0 : index
    %6 = vector.load %arg9[%c0_5, %c0_6] : memref<32x128xf32, #tpu.memory_space<vmem>>, vector<32x128xf32>
    %7 = arith.truncf %6 : vector<32x128xf32> to vector<32x128xbf16>
    %c0_7 = arith.constant 0 : index
    %c0_8 = arith.constant 0 : index
    %8 = vector.load %arg4[%c0_7, %c0_8] : memref<128x128xbf16, #tpu.memory_space<vmem>>, vector<128x128xbf16>
    %cst = arith.constant dense<0.000000e+00> : vector<32x128xf32>
    %9 = tpu.matmul %7, %8, %cst {dimension_numbers = #tpu.dot_dimension_numbers<[1], [0], [0], [1], [0, 0, 1, 1], [], []>} : vector<32x128xbf16>, vector<128x128xbf16>, vector<32x128xf32> -> vector<32x128xf32>
    %c0_9 = arith.constant 0 : index
    %c0_10 = arith.constant 0 : index
    %10 = vector.load %arg5[%c0_9, %c0_10] : memref<1x128xf32, #tpu.memory_space<vmem>>, vector<1x128xf32>
    %11 = vector.broadcast %10 : vector<1x128xf32> to vector<32x128xf32>
    %12 = arith.addf %9, %11 : vector<32x128xf32>
    %cst_11 = arith.constant 0.000000e+00 : f32
    %13 = vector.broadcast %cst_11 : f32 to vector<32x128xf32>
    %14 = arith.maximumf %12, %13 : vector<32x128xf32>
    %15 = arith.truncf %14 : vector<32x128xf32> to vector<32x128xbf16>
    %c0_12 = arith.constant 0 : index
    %c0_13 = arith.constant 0 : index
    %16 = vector.load %arg6[%c0_12, %c0_13] : memref<128x2048xbf16, #tpu.memory_space<vmem>>, vector<128x2048xbf16>
    %cst_14 = arith.constant dense<0.000000e+00> : vector<32x2048xf32>
    %17 = tpu.matmul %15, %16, %cst_14 {dimension_numbers = #tpu.dot_dimension_numbers<[1], [0], [0], [1], [0, 0, 1, 1], [], []>} : vector<32x128xbf16>, vector<128x2048xbf16>, vector<32x2048xf32> -> vector<32x2048xf32>
    %c0_15 = arith.constant 0 : index
    %c0_16 = arith.constant 0 : index
    %18 = vector.load %arg7[%c0_15, %c0_16] : memref<1x2048xf32, #tpu.memory_space<vmem>>, vector<1x2048xf32>
    %19 = vector.broadcast %18 : vector<1x2048xf32> to vector<32x2048xf32>
    %20 = arith.addf %17, %19 : vector<32x2048xf32>
    %cst_17 = arith.constant 0.000000e+00 : f32
    %21 = vector.broadcast %cst_17 : f32 to vector<32x2048xf32>
    %22 = arith.maximumf %20, %21 : vector<32x2048xf32>
    %c1_i32 = arith.constant 1 : i32
    %23 = arith.muli %arg1, %c1_i32 : i32
    %24 = arith.addi %23, %arg2 : i32
    %c32_i32 = arith.constant 32 : i32
    %25 = arith.muli %24, %c32_i32 : i32
    %c32_i32_18 = arith.constant 32 : i32
    %26 = arith.addi %25, %c32_i32_18 : i32
    %c49_i32 = arith.constant 49 : i32
    %27 = arith.cmpi sgt, %26, %c49_i32 : i32
    %true = arith.constant true
    %28 = arith.xori %27, %true : i1
    %29 = arith.extui %28 : i1 to i32
    %c0_i32_19 = arith.constant 0 : i32
    %30 = arith.cmpi ne, %29, %c0_i32_19 : i32
    scf.if %30 {
      %c0_23 = arith.constant 0 : index
      %c0_24 = arith.constant 0 : index
      %36 = vector.load %arg10[%c0_23, %c0_24] : memref<1x2048xf32, #tpu.memory_space<vmem>>, vector<1x2048xf32>
      %cst_25 = arith.constant dense<0.000000e+00> : vector<2048xf32>
      %37 = vector.multi_reduction <add>, %22, %cst_25 [0] : vector<32x2048xf32> to vector<2048xf32>
      %38 = vector.shape_cast %37 : vector<2048xf32> to vector<1x2048xf32>
      %39 = arith.addf %36, %38 : vector<1x2048xf32>
      %c0_26 = arith.constant 0 : index
      %c0_27 = arith.constant 0 : index
      %40 = vector.load %arg10[%c0_26, %c0_27] : memref<1x2048xf32, #tpu.memory_space<vmem>>, vector<1x2048xf32>
      tpu.vector_store %arg10[%c0_26, %c0_27], %39 {strides = array<i32>} : memref<1x2048xf32, #tpu.memory_space<vmem>>, vector<1x2048xf32>,
    } else {
    }
    %31 = arith.extui %27 : i1 to i32
    %c0_i32_20 = arith.constant 0 : i32
    %32 = arith.cmpi ne, %31, %c0_i32_20 : i32
    scf.if %32 {
      %36 = tpu.iota {dimensions = array<i32: 0>} : vector<32x1xi32>
      %37 = vector.broadcast %25 : i32 to vector<32x1xi32>
      %38 = arith.addi %36, %37 : vector<32x1xi32>
      %c49_i32_23 = arith.constant 49 : i32
      %39 = vector.broadcast %c49_i32_23 : i32 to vector<32x1xi32>
      %40 = arith.cmpi slt, %38, %39 : vector<32x1xi32>
      %41 = arith.extui %40 : vector<32x1xi1> to vector<32x1xi32>
      %42 = arith.sitofp %41 : vector<32x1xi32> to vector<32x1xf32>
      %c0_24 = arith.constant 0 : index
      %c0_25 = arith.constant 0 : index
      %43 = vector.load %arg10[%c0_24, %c0_25] : memref<1x2048xf32, #tpu.memory_space<vmem>>, vector<1x2048xf32>
      %44 = vector.broadcast %42 : vector<32x1xf32> to vector<32x2048xf32>
      %45 = arith.mulf %22, %44 : vector<32x2048xf32>
      %cst_26 = arith.constant dense<0.000000e+00> : vector<2048xf32>
      %46 = vector.multi_reduction <add>, %45, %cst_26 [0] : vector<32x2048xf32> to vector<2048xf32>
      %47 = vector.shape_cast %46 : vector<2048xf32> to vector<1x2048xf32>
      %48 = arith.addf %43, %47 : vector<1x2048xf32>
      %c0_27 = arith.constant 0 : index
      %c0_28 = arith.constant 0 : index
      %49 = vector.load %arg10[%c0_27, %c0_28] : memref<1x2048xf32, #tpu.memory_space<vmem>>, vector<1x2048xf32>
      tpu.vector_store %arg10[%c0_27, %c0_28], %48 {strides = array<i32>} : memref<1x2048xf32, #tpu.memory_space<vmem>>, vector<1x2048xf32>,
    } else {
    }
    %c0_i32_21 = arith.constant 0 : i32
    %33 = arith.cmpi eq, %arg2, %c0_i32_21 : i32
    %34 = arith.extui %33 : i1 to i32
    %c0_i32_22 = arith.constant 0 : i32
    %35 = arith.cmpi ne, %34, %c0_i32_22 : i32
    scf.if %35 {
      %c0_23 = arith.constant 0 : index
      %c0_24 = arith.constant 0 : index
      %36 = vector.load %arg10[%c0_23, %c0_24] : memref<1x2048xf32, #tpu.memory_space<vmem>>, vector<1x2048xf32>
      %37 = vector.shape_cast %36 : vector<1x2048xf32> to vector<1x2048xf32>
      %38 = vector.broadcast %37 : vector<1x2048xf32> to vector<8x2048xf32>
      %c0_25 = arith.constant 0 : index
      %c0_26 = arith.constant 0 : index
      %c0_27 = arith.constant 0 : index
      %c0_28 = arith.constant 0 : index
      %39 = vector.load %arg8[%c0_25, %c0_26, %c0_27, %c0_28] : memref<1x1x8x2048xf32, #tpu.memory_space<vmem>>, vector<1x1x8x2048xf32>
      %40 = vector.shape_cast %39 : vector<1x1x8x2048xf32> to vector<8x2048xf32>
      %41 = vector.shape_cast %38 : vector<8x2048xf32> to vector<1x1x8x2048xf32>
      tpu.vector_store %arg8[%c0_25, %c0_26, %c0_27, %c0_28], %41 {strides = array<i32>} : memref<1x1x8x2048xf32, #tpu.memory_space<vmem>>, vector<1x1x8x2048xf32>,
    } else {
    }
    return
  }
  func.func @transform_0(%arg0: i32, %arg1: i32, %arg2: i32) -> (i32, i32, i32) {
    %c1_i32 = arith.constant 1 : i32
    %0 = arith.muli %arg1, %c1_i32 : i32
    %1 = arith.addi %0, %arg2 : i32
    %c0_i32 = arith.constant 0 : i32
    %c0_i32_0 = arith.constant 0 : i32
    return %arg0, %1, %c0_i32 : i32, i32, i32
  }
  func.func @transform_1(%arg0: i32, %arg1: i32, %arg2: i32) -> (i32, i32) {
    %c0_i32 = arith.constant 0 : i32
    %c0_i32_0 = arith.constant 0 : i32
    %c0_i32_1 = arith.constant 0 : i32
    return %c0_i32, %c0_i32_0 : i32, i32
  }
  func.func @transform_2(%arg0: i32, %arg1: i32, %arg2: i32) -> (i32, i32) {
    %c0_i32 = arith.constant 0 : i32
    %c0_i32_0 = arith.constant 0 : i32
    %c0_i32_1 = arith.constant 0 : i32
    return %c0_i32, %c0_i32_0 : i32, i32
  }
  func.func @transform_3(%arg0: i32, %arg1: i32, %arg2: i32) -> (i32, i32) {
    %c0_i32 = arith.constant 0 : i32
    %c0_i32_0 = arith.constant 0 : i32
    %c0_i32_1 = arith.constant 0 : i32
    return %c0_i32, %c0_i32_0 : i32, i32
  }
  func.func @transform_4(%arg0: i32, %arg1: i32, %arg2: i32) -> (i32, i32) {
    %c0_i32 = arith.constant 0 : i32
    %c0_i32_0 = arith.constant 0 : i32
    %c0_i32_1 = arith.constant 0 : i32
    return %c0_i32, %c0_i32_0 : i32, i32
  }
  func.func @transform_5(%arg0: i32, %arg1: i32, %arg2: i32) -> (i32, i32, i32, i32) {
    %c0_i32 = arith.constant 0 : i32
    %c0_i32_0 = arith.constant 0 : i32
    %c0_i32_1 = arith.constant 0 : i32
    return %arg0, %arg1, %c0_i32, %c0_i32_0 : i32, i32, i32, i32
  }
}

</mosaic_0001>

<llo_original>
// kernel: tpu_custom_call.1
$region0: #{tpu_custom_call.1}
  #allocation0 [shape = 'u32[]', space=smem, size = 0x4, offset = 0x4, fixed_abs, tag = 'smem constant byte address 0x4 - core index']
  #allocation1 [shape = 'u32[144,128]{1,0:T(1,128)}', space=vmem, size = 0x12000, scoped, tag = 'internal scratch']
  #allocation2 [shape = 'f32[32,128]{1,0:T(8,128)}', space=vmem, size = 0x4000, scoped, tag = 'scratch operand']
  #allocation3 [shape = 'f32[1,2048]{1,0:T(1,128)}', space=vmem, size = 0x2000, scoped, tag = 'scratch operand']
  %s0 = inlined_call_operand.vmem [shape: f32[2,64,9], index: 0, kind: input, shape index: {}]
  %s1 = inlined_call_operand.vmem [shape: bf16[128,128], index: 1, kind: input, shape index: {}]
  %s2 = inlined_call_operand.vmem [shape: f32[1,128], index: 2, kind: input, shape index: {}]
  %s3 = inlined_call_operand.hbm [shape: bf16[128,2048], index: 3, kind: input, shape index: {}]
  %s4 = inlined_call_operand.vmem [shape: f32[1,2048], index: 4, kind: input, shape index: {}]
  %s5 = inlined_call_operand.hbm [shape: f32[2,2,8,2048], index: 5, kind: output, shape index: {}]
  %s6 = sld [smem:[#allocation0]]
  $region73: #{tpu_custom_call.1} parent=0
    _
  %s8 = ssub.s32 1, %s6
  %s9 = scalar_select 0, %s8, %s6
  $region1: #{tpu_custom_call.1} parent=0
    #allocation4 [shape = 'u8[524288]{0}', space=vmem, size = 0x80000, scoped, tag = 'input window, operand 3, single buffered']
    #allocation5 [shape = 's32[2]{0}', space=sflag, size = 0x8, scoped, tag = 'scoped memory for tpu_custom_call.1']
    #allocation6 [shape = 's32[2]{0}', space=sflag, size = 0x8, scoped, tag = 'scoped memory for tpu_custom_call.1']
    #allocation7 [shape = 'u8[131072]{0}', space=vmem, size = 0x20000, scoped, tag = 'output window, operand 0']
    %10 = vsyncpa [#allocation5], 0
    %11 = vsyncpa [#allocation6], 0
    %s12 = scalar_lea.sflag [#allocation6], 1
    %13 = vsyncpa %s12, 0
    loop: start=0, step=1, limit=6
    $region2: #{tpu_custom_call.1} parent=1 // loop_pre_header
      _
    $region3: #{tpu_custom_call.1} parent=1 // loop_header
      %s15 = sphi 0, %s19
      %p16 = scmp.ge.s32.totalorder %s15, 6
      %s22 = sphi 0, %s41
      %s23 = sphi 0, %s37
      %s24 = sphi 0, %s33
      %s25 = sphi 0, %s22
      %s26 = sphi 0, %s23
      %s27 = sphi 0, %s24
      %s28 = sphi 0, %s25
      %s29 = sphi 0, %s26
      %s30 = sphi 0, %s27
      %s48 = sphi 0, %s50
      %s51 = sphi 0, %s48
      %s52 = sphi 0, %s51
      %s68 = sphi 0, %s52
      %s72 = sphi 0, %s72
      %s74 = sphi 0, %s72
      %s75 = sphi 0, %s74
      %s89 = sphi 0, %s75
      %s93 = sphi 0, %s93
      %s95 = sphi 0, %s93
      %s96 = sphi 0, %s95
      %s110 = sphi 0, %s96
      %s114 = sphi 0, %s114
      %s116 = sphi 0, %s114
      %s117 = sphi 0, %s116
      %s131 = sphi 0, %s117
      %s135 = sphi 0, %s135
      %s137 = sphi 0, %s135
      %s138 = sphi 0, %s137
      %s152 = sphi 0, %s138
      %s160 = sphi 0, %s162
      %s163 = sphi 0, %s160
      %s164 = sphi 0, %s163
      %s180 = sphi 0, %s164
    $region4: #{tpu_custom_call.1} parent=1 // loop_header_branch
      %18 = sbr.rel (%p16) target = $region8
    $region5: #{tpu_custom_call.1} parent=1 // loop_body
      %s20 = ssub.s32 %s15, 1
      %s21 = ssub.s32 %s15, 2
      %s31 = sadd.s32 1, %s24
      %p32 = scmp.ge.s32.totalorder %s31, 1
      %s33 = scalar_select %p32, 0, %s31
      %s34 = sadd.s32 1, %s23
      %s35 = scalar_select %p32, %s34, %s23
      %p36 = scmp.ge.s32.totalorder %s35, 2
      %s37 = scalar_select %p36, 0, %s35
      %s38 = sadd.s32 1, %s22
      %s39 = scalar_select %p36, %s38, %s22
      %p40 = scmp.ge.s32.totalorder %s39, 2
      %s41 = scalar_select %p40, 0, %s39
      %s42 = sadd.s32 %s23, %s24
      %s43 = sadd.s32 %s37, %s33
      %s44 = ssub.s32 %s22, %s41
      %s45 = ssub.s32 %s42, %s43
      %s46 = sor.u32 %s44, %s45
      %p47 = scmp.eq.s32.totalorder %s46, 0
      %s49 = sadd.s32 %s48, 1
      %s50 = scalar_select %p47, %s48, %s49
      %p53 = pneg %p47
      %p54 = scmp.eq.s32.totalorder %s15, 3
      %p55 = por %p53, %p54
      %p56 = scmp.ne.s32.totalorder %s48, %s51
      %p57 = scmp.eq.s32.totalorder %s15, 0
      %p58 = por %p56, %p57
      %p59 = scmp.ne.s32.totalorder %s48, %s51
      %p60 = scmp.eq.s32.totalorder %s20, 3
      %p61 = por %p59, %p60
      %p62 = scmp.ne.s32.totalorder %s51, %s52
      %p63 = scmp.eq.s32.totalorder %s20, 0
      %p64 = por %p62, %p63
      %p65 = scmp.ne.s32.totalorder %s51, %s52
      %p66 = scmp.eq.s32.totalorder %s21, 3
      %p67 = por %p65, %p66
      %p69 = scmp.ne.s32.totalorder %s52, %s68
      %p70 = scmp.eq.s32.totalorder %s21, 0
      %p71 = por %p69, %p70
      %s73 = sadd.s32 %s72, 1
      %p76 = scmp.eq.s32.totalorder %s15, 3
      %p77 = scmp.ne.s32.totalorder %s72, %s74
      %p78 = scmp.eq.s32.totalorder %s15, 0
      %p79 = por %p77, %p78
      %p80 = scmp.ne.s32.totalorder %s72, %s74
      %p81 = scmp.eq.s32.totalorder %s20, 3
      %p82 = por %p80, %p81
      %p83 = scmp.ne.s32.totalorder %s74, %s75
      %p84 = scmp.eq.s32.totalorder %s20, 0
      %p85 = por %p83, %p84
      %p86 = scmp.ne.s32.totalorder %s74, %s75
      %p87 = scmp.eq.s32.totalorder %s21, 3
      %p88 = por %p86, %p87
      %p90 = scmp.ne.s32.totalorder %s75, %s89
      %p91 = scmp.eq.s32.totalorder %s21, 0
      %p92 = por %p90, %p91
      %s94 = sadd.s32 %s93, 1
      %p97 = scmp.eq.s32.totalorder %s15, 3
      %p98 = scmp.ne.s32.totalorder %s93, %s95
      %p99 = scmp.eq.s32.totalorder %s15, 0
      %p100 = por %p98, %p99
      %p101 = scmp.ne.s32.totalorder %s93, %s95
      %p102 = scmp.eq.s32.totalorder %s20, 3
      %p103 = por %p101, %p102
      %p104 = scmp.ne.s32.totalorder %s95, %s96
      %p105 = scmp.eq.s32.totalorder %s20, 0
      %p106 = por %p104, %p105
      %p107 = scmp.ne.s32.totalorder %s95, %s96
      %p108 = scmp.eq.s32.totalorder %s21, 3
      %p109 = por %p107, %p108
      %p111 = scmp.ne.s32.totalorder %s96, %s110
      %p112 = scmp.eq.s32.totalorder %s21, 0
      %p113 = por %p111, %p112
      %s115 = sadd.s32 %s114, 1
      %p118 = scmp.eq.s32.totalorder %s15, 3
      %p119 = scmp.ne.s32.totalorder %s114, %s116
      %p120 = scmp.eq.s32.totalorder %s15, 0
      %p121 = por %p119, %p120
      %p122 = scmp.ne.s32.totalorder %s114, %s116
      %p123 = scmp.eq.s32.totalorder %s20, 3
      %p124 = por %p122, %p123
      %p125 = scmp.ne.s32.totalorder %s116, %s117
      %p126 = scmp.eq.s32.totalorder %s20, 0
      %p127 = por %p125, %p126
      %p128 = scmp.ne.s32.totalorder %s116, %s117
      %p129 = scmp.eq.s32.totalorder %s21, 3
      %p130 = por %p128, %p129
      %p132 = scmp.ne.s32.totalorder %s117, %s131
      %p133 = scmp.eq.s32.totalorder %s21, 0
      %p134 = por %p132, %p133
      %s136 = sadd.s32 %s135, 1
      %p139 = scmp.eq.s32.totalorder %s15, 3
      %p140 = scmp.ne.s32.totalorder %s135, %s137
      %p141 = scmp.eq.s32.totalorder %s15, 0
      %p142 = por %p140, %p141
      %p143 = scmp.ne.s32.totalorder %s135, %s137
      %p144 = scmp.eq.s32.totalorder %s20, 3
      %p145 = por %p143, %p144
      %p146 = scmp.ne.s32.totalorder %s137, %s138
      %p147 = scmp.eq.s32.totalorder %s20, 0
      %p148 = por %p146, %p147
      %p149 = scmp.ne.s32.totalorder %s137, %s138
      %p150 = scmp.eq.s32.totalorder %s21, 3
      %p151 = por %p149, %p150
      %p153 = scmp.ne.s32.totalorder %s138, %s152
      %p154 = scmp.eq.s32.totalorder %s21, 0
      %p155 = por %p153, %p154
      %s156 = ssub.s32 %s22, %s41
      %s157 = ssub.s32 %s23, %s37
      %s158 = sor.u32 %s156, %s157
      %p159 = scmp.eq.s32.totalorder %s158, 0
      %s161 = sadd.s32 %s160, 1
      %s162 = scalar_select %p159, %s160, %s161
      %p165 = pneg %p159
      %p166 = scmp.eq.s32.totalorder %s15, 3
      %p167 = por %p165, %p166
      %p168 = scmp.ne.s32.totalorder %s160, %s163
      %p169 = scmp.eq.s32.totalorder %s15, 0
      %p170 = por %p168, %p169
      %p171 = scmp.ne.s32.totalorder %s160, %s163
      %p172 = scmp.eq.s32.totalorder %s20, 3
      %p173 = por %p171, %p172
      %p174 = scmp.ne.s32.totalorder %s163, %s164
      %p175 = scmp.eq.s32.totalorder %s20, 0
      %p176 = por %p174, %p175
      %p177 = scmp.ne.s32.totalorder %s163, %s164
      %p178 = scmp.eq.s32.totalorder %s21, 3
      %p179 = por %p177, %p178
      %p181 = scmp.ne.s32.totalorder %s164, %s180
      %p182 = scmp.eq.s32.totalorder %s21, 0
      %p183 = por %p181, %p182
      %p184 = scmp.le.s32.totalorder 1, %s15
      %p185 = scmp.lt.s32.totalorder %s15, 5
      %p186 = pnand %p184, %p185
      %p187 = pneg %p186
      // Predicated region
      $region9: #{tpu_custom_call.1} parent=5 // pred_check
        _
      $region10: #{tpu_custom_call.1} parent=5 // pred_check_branch
        %189 = sbr.rel (%p186) target = $region12
      $region11: #{tpu_custom_call.1} parent=5 // pred_region
        %s190 = ssub.s32 %s15, 1
        // Predicated region
        $region13: #{tpu_custom_call.1} parent=11 // pred_check
          %p191 = pneg %p85
        $region14: #{tpu_custom_call.1} parent=11 // pred_check_branch
          %193 = sbr.rel (%p191) target = $region16
        $region15: #{tpu_custom_call.1} parent=11 // pred_region
          _
        $region16: #{tpu_custom_call.1} parent=11 // pred_fallthru
          _
        // Predicated region
        $region17: #{tpu_custom_call.1} parent=11 // pred_check
          %p194 = pneg %p106
        $region18: #{tpu_custom_call.1} parent=11 // pred_check_branch
          %196 = sbr.rel (%p194) target = $region20
        $region19: #{tpu_custom_call.1} parent=11 // pred_region
          _
        $region20: #{tpu_custom_call.1} parent=11 // pred_fallthru
          _
        // Predicated region
        $region21: #{tpu_custom_call.1} parent=11 // pred_check
          %p197 = pneg %p127
        $region22: #{tpu_custom_call.1} parent=11 // pred_check_branch
          %199 = sbr.rel (%p197) target = $region24
        $region23: #{tpu_custom_call.1} parent=11 // pred_region
          %s201 = ssub.s32 16384, 16384
          %202 = vsyncadd [#allocation5], %s201
          %s203 = sshll.u32 [#allocation4], 4
          %s204 = int_to_ptr.vmem [resolvable:$true] %s203
          %209 = dma.hbm_to_vmem [thread:$0]  %s3, 16384, %s204, [#allocation5], 1024, 1024, 64
        $region24: #{tpu_custom_call.1} parent=11 // pred_fallthru
          _
        // Predicated region
        $region25: #{tpu_custom_call.1} parent=11 // pred_check
          %p210 = pneg %p148
        $region26: #{tpu_custom_call.1} parent=11 // pred_check_branch
          %212 = sbr.rel (%p210) target = $region28
        $region27: #{tpu_custom_call.1} parent=11 // pred_region
          _
        $region28: #{tpu_custom_call.1} parent=11 // pred_fallthru
          _
      $region12: #{tpu_custom_call.1} parent=5 // pred_fallthru
        _
      %p213 = scmp.lt.s32.totalorder %s15, 4
      // Predicated region
      $region29: #{tpu_custom_call.1} parent=5 // pred_check
        %p214 = pneg %p213
      $region30: #{tpu_custom_call.1} parent=5 // pred_check_branch
        %216 = sbr.rel (%p214) target = $region32
      $region31: #{tpu_custom_call.1} parent=5 // pred_region
        // Predicated region
        $region33: #{tpu_custom_call.1} parent=31 // pred_check
          %p217 = pneg %p58
        $region34: #{tpu_custom_call.1} parent=31 // pred_check_branch
          %219 = sbr.rel (%p217) target = $region36
        $region35: #{tpu_custom_call.1} parent=31 // pred_region
          %s220 = sadd.s32 %s23, %s24
          %s221 = smul.u32 4, %s220
          %p222 = scmp.lt.s32.totalorder %s22, 1
          %s223 = scalar_select %p222, %s22, 1
          %p224 = scmp.lt.s32.totalorder %s221, 7
          %s225 = scalar_select %p224, %s221, 7
          %s226 = smul.addr %s223, 8
          %s227 = sadd.s32 %s225, %s226
          %s228 = smul.addr %s227, 8
          %s229 = scalar_lea.vmem %s0, %s228
          %s230 = sadd.s32 %s23, %s24
          %s231 = smul.u32 4, %s230
        $region36: #{tpu_custom_call.1} parent=31 // pred_fallthru
          _
      $region32: #{tpu_custom_call.1} parent=5 // pred_fallthru
        _
      %p232 = scmp.le.s32.totalorder 1, %s15
      %p233 = scmp.lt.s32.totalorder %s15, 5
      %p234 = pnand %p232, %p233
      %p235 = pneg %p234
      // Predicated region
      $region37: #{tpu_custom_call.1} parent=5 // pred_check
        _
      $region38: #{tpu_custom_call.1} parent=5 // pred_check_branch
        %237 = sbr.rel (%p234) target = $region40
      $region39: #{tpu_custom_call.1} parent=5 // pred_region
        %s238 = ssub.s32 %s15, 1
        // Predicated region
        $region41: #{tpu_custom_call.1} parent=39 // pred_check
          %p239 = pneg %p127
        $region42: #{tpu_custom_call.1} parent=39 // pred_check_branch
          %241 = sbr.rel (%p239) target = $region44
        $region43: #{tpu_custom_call.1} parent=39 // pred_region
          %242 = dma.done [#allocation5], 16384
        $region44: #{tpu_custom_call.1} parent=39 // pred_fallthru
          _
        %s243 = sadd.s32 %s26, %s27
        %s244 = smul.u32 4, %s243
        %p245 = scmp.lt.s32.totalorder %s25, 1
        %s246 = scalar_select %p245, %s25, 1
        %p247 = scmp.lt.s32.totalorder %s244, 7
        %s248 = scalar_select %p247, %s244, 7
        %s249 = smul.addr %s246, 8
        %s250 = sadd.s32 %s248, %s249
        %s251 = smul.addr %s250, 8
        %s252 = scalar_lea.vmem %s0, %s251
        %p253 = pneg %p64
        %p254 = pneg %p61
        %p255 = pneg %p85
        %p256 = pneg %p82
        %p257 = pneg %p106
        %p258 = pneg %p103
        %p259 = pneg %p127
        %p260 = pneg %p124
        %p261 = pneg %p148
        %p262 = pneg %p145
        %p263 = pneg %p176
        %p264 = pneg %p173
        %s265 = sand.u32 %s163, 1
        %s266 = scalar_lea.sflag [#allocation6], %s265
        %s267 = sand.u32 %s163, 1
        %s268 = smul.addr %s267, 128
        %s269 = scalar_lea.vmem [#allocation7], %s268
        %s270 = sadd.s32 %s26, %s27
        %s271 = smul.u32 4, %s270
        %p272 = scmp.lt.s32.totalorder %s25, 1
        %s273 = scalar_select %p272, %s25, 1
        %p274 = scmp.lt.s32.totalorder %s271, 7
        %s275 = scalar_select %p274, %s271, 7
        %s276 = smul.addr %s273, 8
        %s277 = sadd.s32 %s275, %s276
        %s278 = smul.addr %s277, 8
        %s279 = scalar_lea.vmem %s0, %s278
        %s280 = sadd.s32 %s26, %s27
        %s281 = smul.u32 4, %s280
        %p283 = scmp.eq.s32.totalorder %s27, 0
        // Predicated region
        $region45: #{tpu_custom_call.1} parent=39 // pred_check
          %p284 = pneg %p283
        $region46: #{tpu_custom_call.1} parent=39 // pred_check_branch
          %286 = sbr.rel (%p284) target = $region48
        $region47: #{tpu_custom_call.1} parent=39 // pred_region
          %287 = vst [vmem:[#allocation3] sm:$0xff] 0.0
          %288 = vst [vmem:[#allocation3 + $0x8] sm:$0xff] 0.0
          %289 = vst [vmem:[#allocation2] sm:$0xff] 0.0
          %290 = vst [vmem:[#allocation2 + $0x8] sm:$0xff] 0.0
          %291 = vst [vmem:[#allocation2 + $0x10] sm:$0xff] 0.0
          %292 = vst [vmem:[#allocation2 + $0x18] sm:$0xff] 0.0
        $region48: #{tpu_custom_call.1} parent=39 // pred_fallthru
          _
        %v293 = vld [vmem:[%s279] sm:$0xff]
        %v294 = vld [vmem:[%s279 + $0x8] sm:$0xff]
        %v295 = vld [vmem:[%s279 + $0x10] sm:$0xff]
        %v296 = vld [vmem:[%s279 + $0x18] sm:$0xff]
        %vm297 = vcmask 72704
        %298 = vst.msk [vmem:[#allocation2] sm:$0xff] %vm297, %v293
        %299 = vst.msk [vmem:[#allocation2 + $0x8] sm:$0xff] %vm297, %v294
        %300 = vst.msk [vmem:[#allocation2 + $0x10] sm:$0xff] %vm297, %v295
        %301 = vst.msk [vmem:[#allocation2 + $0x18] sm:$0xff] %vm297, %v296
        %v302 = vld [vmem:[#allocation2] sm:$0xff]
        %v303 = vld [vmem:[#allocation2 + $0x8] sm:$0xff]
        %v304 = vld [vmem:[#allocation2 + $0x10] sm:$0xff]
        %v305 = vld [vmem:[#allocation2 + $0x18] sm:$0xff]
        %v306 = vpack.c.bf16 %v303, %v302
        %v307 = vpack.c.bf16 %v305, %v304
        %v308 = vld [vmem:[%s1] sm:$0xf]
        %v309 = vld [vmem:[%s1 + $0x4] sm:$0xf]
        %v310 = vld [vmem:[%s1 + $0x8] sm:$0xf]
        %v311 = vld [vmem:[%s1 + $0xc] sm:$0xf]
        %v312 = vld [vmem:[%s1 + $0x10] sm:$0xf]
        %v313 = vld [vmem:[%s1 + $0x14] sm:$0xf]
        %v314 = vld [vmem:[%s1 + $0x18] sm:$0xf]
        %v315 = vld [vmem:[%s1 + $0x1c] sm:$0xf]
        %v316 = vld [vmem:[%s1 + $0x20] sm:$0xf]
        %v317 = vld [vmem:[%s1 + $0x24] sm:$0xf]
        %v318 = vld [vmem:[%s1 + $0x28] sm:$0xf]
        %v319 = vld [vmem:[%s1 + $0x2c] sm:$0xf]
        %v320 = vld [vmem:[%s1 + $0x30] sm:$0xf]
        %v321 = vld [vmem:[%s1 + $0x34] sm:$0xf]
        %v322 = vld [vmem:[%s1 + $0x38] sm:$0xf]
        %v323 = vld [vmem:[%s1 + $0x3c] sm:$0xf]
        %v324 = vld [vmem:[%s2] sm:$0x1]
        %v326 = vlaneseq
        %v327 = vshrl.u32 %v326, 7
        %v328 = vsub.s32 0, %v327
        %v329 = vrot.slane %v324, %v328
        %v347 = vunpack.c.l.b16 %v308
        %v348 = vunpack.c.l.b16 %v309
        %v349 = vunpack.c.l.b16 %v310
        %v350 = vunpack.c.l.b16 %v311
        %v351 = vunpack.c.l.b16 %v312
        %v352 = vunpack.c.l.b16 %v313
        %v353 = vunpack.c.l.b16 %v314
        %v354 = vunpack.c.l.b16 %v315
        %v355 = vunpack.c.l.b16 %v316
        %v356 = vunpack.c.l.b16 %v317
        %v357 = vunpack.c.l.b16 %v318
        %v358 = vunpack.c.l.b16 %v319
        %v359 = vunpack.c.l.b16 %v320
        %v360 = vunpack.c.l.b16 %v321
        %v361 = vunpack.c.l.b16 %v322
        %v362 = vunpack.c.l.b16 %v323
        %v363 = vpack.c.b16 %v348, %v347
        %v364 = vpack.c.b16 %v350, %v349
        %v365 = vpack.c.b16 %v352, %v351
        %v366 = vpack.c.b16 %v354, %v353
        %v367 = vpack.c.b16 %v356, %v355
        %v368 = vpack.c.b16 %v358, %v357
        %v369 = vpack.c.b16 %v360, %v359
        %v370 = vpack.c.b16 %v362, %v361
        %379 = vmatprep.subr.bf16.mxu0 0
        %380 = vmatpush1.bf16.msra.mxu0 %v363
        %381 = vmatprep.subr.bf16.mxu0 0
        %382 = vmatpush1.bf16.msra.mxu0 %v364
        %383 = vmatprep.subr.bf16.mxu0 0
        %384 = vmatpush1.bf16.msra.mxu0 %v365
        %385 = vmatprep.subr.bf16.mxu0 0
        %386 = vmatpush1.bf16.msra.mxu0 %v366
        %387 = vmatprep.subr.bf16.mxu0 0
        %388 = vmatpush1.bf16.msra.mxu0 %v367
        %389 = vmatprep.subr.bf16.mxu0 0
        %390 = vmatpush1.bf16.msra.mxu0 %v368
        %391 = vmatprep.subr.bf16.mxu0 0
        %392 = vmatpush1.bf16.msra.mxu0 %v369
        %393 = vmatprep.subr.bf16.mxu0 0
        %394 = vmatpush1.bf16.msra.mxu0 %v370
        %395 = vmatprep.subr.bf16.mxu0 0
        %396 = vmatpush1.bf16.msra.mxu0 0
        %397 = vmatprep.subr.bf16.mxu0 0
        %398 = vmatpush1.bf16.msra.mxu0 0
        %399 = vmatprep.subr.bf16.mxu0 0
        %400 = vmatpush1.bf16.msra.mxu0 0
        %401 = vmatprep.subr.bf16.mxu0 0
        %402 = vmatpush1.bf16.msra.mxu0 0
        %403 = vmatprep.subr.bf16.mxu0 0
        %404 = vmatpush1.bf16.msra.mxu0 0
        %405 = vmatprep.subr.bf16.mxu0 0
        %406 = vmatpush1.bf16.msra.mxu0 0
        %407 = vmatprep.subr.bf16.mxu0 0
        %408 = vmatpush1.bf16.msra.mxu0 0
        %409 = vmatprep.subr.bf16.mxu0 0
        %410 = vmatpush1.bf16.msra.mxu0 0
        %411 = vmatprep.mubr.bf16.mxu0 0
        %412 = vmatmul.mubr.bf16.gmra.mrb[0].mxu0 %v306
        %v413 = vpop.f32.mrb[0].mxu0
        %v414 = vadd.f32 %v329, %v413
        %v415 = vpop.f32.mrb[0].mxu0
        %v416 = vpop.f32.mrb[0].mxu0
        %v417 = vadd.f32 %v329, %v416
        %v418 = vpop.f32.mrb[0].mxu0
        %419 = vmatprep.mubr.bf16.mxu0 0
        %420 = vmatmul.mubr.bf16.gmra.mrb[0].mxu0 %v307
        %v421 = vpop.f32.mrb[0].mxu0
        %v422 = vadd.f32 %v329, %v421
        %v423 = vpop.f32.mrb[0].mxu0
        %v424 = vpop.f32.mrb[0].mxu0
        %v425 = vadd.f32 %v329, %v424
        %v426 = vpop.f32.mrb[0].mxu0
        %427 = vdwg.mxu0
        %v428 = vmax.f32 %v414, 0.0
        %v429 = vmax.f32 %v417, 0.0
        %v430 = vmax.f32 %v422, 0.0
        %v431 = vmax.f32 %v425, 0.0
        %v432 = vpack.c.bf16 %v429, %v428
        %v433 = vpack.c.bf16 %v431, %v430
        %v434 = vld [vmem:[#allocation4] sm:$0xff]
        %v435 = vld [vmem:[#allocation4 + $0x8] sm:$0xff]
        %v436 = vld [vmem:[#allocation4 + $0x10] sm:$0xff]
        %v437 = vld [vmem:[#allocation4 + $0x18] sm:$0xff]
        %v438 = vld [vmem:[#allocation4 + $0x20] sm:$0xff]
        %v439 = vld [vmem:[#allocation4 + $0x28] sm:$0xff]
        %v440 = vld [vmem:[#allocation4 + $0x30] sm:$0xff]
        %v441 = vld [vmem:[#allocation4 + $0x38] sm:$0xff]
        %v442 = vld [vmem:[#allocation4 + $0x40] sm:$0xff]
        %v443 = vld [vmem:[#allocation4 + $0x48] sm:$0xff]
        %v444 = vld [vmem:[#allocation4 + $0x50] sm:$0xff]
        %v445 = vld [vmem:[#allocation4 + $0x58] sm:$0xff]
        %v446 = vld [vmem:[#allocation4 + $0x60] sm:$0xff]
        %v447 = vld [vmem:[#allocation4 + $0x68] sm:$0xff]
        %v448 = vld [vmem:[#allocation4 + $0x70] sm:$0xff]
        %v449 = vld [vmem:[#allocation4 + $0x78] sm:$0xff]
        %v450 = vld [vmem:[#allocation4 + $0x80] sm:$0xff]
        %v451 = vld [vmem:[#allocation4 + $0x88] sm:$0xff]
        %v452 = vld [vmem:[#allocation4 + $0x90] sm:$0xff]
        %v453 = vld [vmem:[#allocation4 + $0x98] sm:$0xff]
        %v454 = vld [vmem:[#allocation4 + $0xa0] sm:$0xff]
        %v455 = vld [vmem:[#allocation4 + $0xa8] sm:$0xff]
        %v456 = vld [vmem:[#allocation4 + $0xb0] sm:$0xff]
        %v457 = vld [vmem:[#allocation4 + $0xb8] sm:$0xff]
        %v458 = vld [vmem:[#allocation4 + $0xc0] sm:$0xff]
        %v459 = vld [vmem:[#allocation4 + $0xc8] sm:$0xff]
        %v460 = vld [vmem:[#allocation4 + $0xd0] sm:$0xff]
        %v461 = vld [vmem:[#allocation4 + $0xd8] sm:$0xff]
        %v462 = vld [vmem:[#allocation4 + $0xe0] sm:$0xff]
        %v463 = vld [vmem:[#allocation4 + $0xe8] sm:$0xff]
        %v464 = vld [vmem:[#allocation4 + $0xf0] sm:$0xff]
        %v465 = vld [vmem:[#allocation4 + $0xf8] sm:$0xff]
        %v466 = vld [vmem:[#allocation4 + $0x100] sm:$0xff]
        %v467 = vld [vmem:[#allocation4 + $0x108] sm:$0xff]
        %v468 = vld [vmem:[#allocation4 + $0x110] sm:$0xff]
        %v469 = vld [vmem:[#allocation4 + $0x118] sm:$0xff]
        %v470 = vld [vmem:[#allocation4 + $0x120] sm:$0xff]
        %v471 = vld [vmem:[#allocation4 + $0x128] sm:$0xff]
        %v472 = vld [vmem:[#allocation4 + $0x130] sm:$0xff]
        %v473 = vld [vmem:[#allocation4 + $0x138] sm:$0xff]
        %v474 = vld [vmem:[#allocation4 + $0x140] sm:$0xff]
        %v475 = vld [vmem:[#allocation4 + $0x148] sm:$0xff]
        %v476 = vld [vmem:[#allocation4 + $0x150] sm:$0xff]
        %v477 = vld [vmem:[#allocation4 + $0x158] sm:$0xff]
        %v478 = vld [vmem:[#allocation4 + $0x160] sm:$0xff]
        %v479 = vld [vmem:[#allocation4 + $0x168] sm:$0xff]
        %v480 = vld [vmem:[#allocation4 + $0x170] sm:$0xff]
        %v481 = vld [vmem:[#allocation4 + $0x178] sm:$0xff]
        %v482 = vld [vmem:[#allocation4 + $0x180] sm:$0xff]
        %v483 = vld [vmem:[#allocation4 + $0x188] sm:$0xff]
        %v484 = vld [vmem:[#allocation4 + $0x190] sm:$0xff]
        %v485 = vld [vmem:[#allocation4 + $0x198] sm:$0xff]
        %v486 = vld [vmem:[#allocation4 + $0x1a0] sm:$0xff]
        %v487 = vld [vmem:[#allocation4 + $0x1a8] sm:$0xff]
        %v488 = vld [vmem:[#allocation4 + $0x1b0] sm:$0xff]
        %v489 = vld [vmem:[#allocation4 + $0x1b8] sm:$0xff]
        %v490 = vld [vmem:[#allocation4 + $0x1c0] sm:$0xff]
        %v491 = vld [vmem:[#allocation4 + $0x1c8] sm:$0xff]
        %v492 = vld [vmem:[#allocation4 + $0x1d0] sm:$0xff]
        %v493 = vld [vmem:[#allocation4 + $0x1d8] sm:$0xff]
        %v494 = vld [vmem:[#allocation4 + $0x1e0] sm:$0xff]
        %v495 = vld [vmem:[#allocation4 + $0x1e8] sm:$0xff]
        %v496 = vld [vmem:[#allocation4 + $0x1f0] sm:$0xff]
        %v497 = vld [vmem:[#allocation4 + $0x1f8] sm:$0xff]
        %v498 = vld [vmem:[#allocation4 + $0x200] sm:$0xff]
        %v499 = vld [vmem:[#allocation4 + $0x208] sm:$0xff]
        %v500 = vld [vmem:[#allocation4 + $0x210] sm:$0xff]
        %v501 = vld [vmem:[#allocation4 + $0x218] sm:$0xff]
        %v502 = vld [vmem:[#allocation4 + $0x220] sm:$0xff]
        %v503 = vld [vmem:[#allocation4 + $0x228] sm:$0xff]
        %v504 = vld [vmem:[#allocation4 + $0x230] sm:$0xff]
        %v505 = vld [vmem:[#allocation4 + $0x238] sm:$0xff]
        %v506 = vld [vmem:[#allocation4 + $0x240] sm:$0xff]
        %v507 = vld [vmem:[#allocation4 + $0x248] sm:$0xff]
        %v508 = vld [vmem:[#allocation4 + $0x250] sm:$0xff]
        %v509 = vld [vmem:[#allocation4 + $0x258] sm:$0xff]
        %v510 = vld [vmem:[#allocation4 + $0x260] sm:$0xff]
        %v511 = vld [vmem:[#allocation4 + $0x268] sm:$0xff]
        %v512 = vld [vmem:[#allocation4 + $0x270] sm:$0xff]
        %v513 = vld [vmem:[#allocation4 + $0x278] sm:$0xff]
        %v514 = vld [vmem:[#allocation4 + $0x280] sm:$0xff]
        %v515 = vld [vmem:[#allocation4 + $0x288] sm:$0xff]
        %v516 = vld [vmem:[#allocation4 + $0x290] sm:$0xff]
        %v517 = vld [vmem:[#allocation4 + $0x298] sm:$0xff]
        %v518 = vld [vmem:[#allocation4 + $0x2a0] sm:$0xff]
        %v519 = vld [vmem:[#allocation4 + $0x2a8] sm:$0xff]
        %v520 = vld [vmem:[#allocation4 + $0x2b0] sm:$0xff]
        %v521 = vld [vmem:[#allocation4 + $0x2b8] sm:$0xff]
        %v522 = vld [vmem:[#allocation4 + $0x2c0] sm:$0xff]
        %v523 = vld [vmem:[#allocation4 + $0x2c8] sm:$0xff]
        %v524 = vld [vmem:[#allocation4 + $0x2d0] sm:$0xff]
        %v525 = vld [vmem:[#allocation4 + $0x2d8] sm:$0xff]
        %v526 = vld [vmem:[#allocation4 + $0x2e0] sm:$0xff]
        %v527 = vld [vmem:[#allocation4 + $0x2e8] sm:$0xff]
        %v528 = vld [vmem:[#allocation4 + $0x2f0] sm:$0xff]
        %v529 = vld [vmem:[#allocation4 + $0x2f8] sm:$0xff]
        %v530 = vld [vmem:[#allocation4 + $0x300] sm:$0xff]
        %v531 = vld [vmem:[#allocation4 + $0x308] sm:$0xff]
        %v532 = vld [vmem:[#allocation4 + $0x310] sm:$0xff]
        %v533 = vld [vmem:[#allocation4 + $0x318] sm:$0xff]
        %v534 = vld [vmem:[#allocation4 + $0x320] sm:$0xff]
        %v535 = vld [vmem:[#allocation4 + $0x328] sm:$0xff]
        %v536 = vld [vmem:[#allocation4 + $0x330] sm:$0xff]
        %v537 = vld [vmem:[#allocation4 + $0x338] sm:$0xff]
        %v538 = vld [vmem:[#allocation4 + $0x340] sm:$0xff]
        %v539 = vld [vmem:[#allocation4 + $0x348] sm:$0xff]
        %v540 = vld [vmem:[#allocation4 + $0x350] sm:$0xff]
        %v541 = vld [vmem:[#allocation4 + $0x358] sm:$0xff]
        %v542 = vld [vmem:[#allocation4 + $0x360] sm:$0xff]
        %v543 = vld [vmem:[#allocation4 + $0x368] sm:$0xff]
        %v544 = vld [vmem:[#allocation4 + $0x370] sm:$0xff]
        %v545 = vld [vmem:[#allocation4 + $0x378] sm:$0xff]
        %v546 = vld [vmem:[#allocation4 + $0x380] sm:$0xff]
        %v547 = vld [vmem:[#allocation4 + $0x388] sm:$0xff]
        %v548 = vld [vmem:[#allocation4 + $0x390] sm:$0xff]
        %v549 = vld [vmem:[#allocation4 + $0x398] sm:$0xff]
        %v550 = vld [vmem:[#allocation4 + $0x3a0] sm:$0xff]
        %v551 = vld [vmem:[#allocation4 + $0x3a8] sm:$0xff]
        %v552 = vld [vmem:[#allocation4 + $0x3b0] sm:$0xff]
        %v553 = vld [vmem:[#allocation4 + $0x3b8] sm:$0xff]
        %v554 = vld [vmem:[#allocation4 + $0x3c0] sm:$0xff]
        %v555 = vld [vmem:[#allocation4 + $0x3c8] sm:$0xff]
        %v556 = vld [vmem:[#allocation4 + $0x3d0] sm:$0xff]
        %v557 = vld [vmem:[#allocation4 + $0x3d8] sm:$0xff]
        %v558 = vld [vmem:[#allocation4 + $0x3e0] sm:$0xff]
        %v559 = vld [vmem:[#allocation4 + $0x3e8] sm:$0xff]
        %v560 = vld [vmem:[#allocation4 + $0x3f0] sm:$0xff]
        %v561 = vld [vmem:[#allocation4 + $0x3f8] sm:$0xff]
        %v562 = vld [vmem:[%s4] sm:$0xff]
        %v563 = vld [vmem:[%s4 + $0x8] sm:$0xff]
        %v566 = vlaneseq
        %v567 = vshrl.u32 %v566, 7
        %v568 = vsub.s32 0, %v567
        %v569 = vrot.slane %v562, %v568
        %v570 = vlaneseq
        %v571 = vshrl.u32 %v570, 7
        %v572 = vsub.s32 1, %v571
        %v573 = vrot.slane %v562, %v572
        %v574 = vlaneseq
        %v575 = vshrl.u32 %v574, 7
        %v576 = vsub.s32 2, %v575
        %v577 = vrot.slane %v562, %v576
        %v578 = vlaneseq
        %v579 = vshrl.u32 %v578, 7
        %v580 = vsub.s32 3, %v579
        %v581 = vrot.slane %v562, %v580
        %v582 = vlaneseq
        %v583 = vshrl.u32 %v582, 7
        %v584 = vsub.s32 4, %v583
        %v585 = vrot.slane %v562, %v584
        %v586 = vlaneseq
        %v587 = vshrl.u32 %v586, 7
        %v588 = vsub.s32 5, %v587
        %v589 = vrot.slane %v562, %v588
        %v590 = vlaneseq
        %v591 = vshrl.u32 %v590, 7
        %v592 = vsub.s32 6, %v591
        %v593 = vrot.slane %v562, %v592
        %v594 = vlaneseq
        %v595 = vshrl.u32 %v594, 7
        %v596 = vsub.s32 7, %v595
        %v597 = vrot.slane %v562, %v596
        %v598 = vlaneseq
        %v599 = vshrl.u32 %v598, 7
        %v600 = vsub.s32 0, %v599
        %v601 = vrot.slane %v563, %v600
        %v602 = vlaneseq
        %v603 = vshrl.u32 %v602, 7
        %v604 = vsub.s32 1, %v603
        %v605 = vrot.slane %v563, %v604
        %v606 = vlaneseq
        %v607 = vshrl.u32 %v606, 7
        %v608 = vsub.s32 2, %v607
        %v609 = vrot.slane %v563, %v608
        %v610 = vlaneseq
        %v611 = vshrl.u32 %v610, 7
        %v612 = vsub.s32 3, %v611
        %v613 = vrot.slane %v563, %v612
        %v614 = vlaneseq
        %v615 = vshrl.u32 %v614, 7
        %v616 = vsub.s32 4, %v615
        %v617 = vrot.slane %v563, %v616
        %v618 = vlaneseq
        %v619 = vshrl.u32 %v618, 7
        %v620 = vsub.s32 5, %v619
        %v621 = vrot.slane %v563, %v620
        %v622 = vlaneseq
        %v623 = vshrl.u32 %v622, 7
        %v624 = vsub.s32 6, %v623
        %v625 = vrot.slane %v563, %v624
        %v626 = vlaneseq
        %v627 = vshrl.u32 %v626, 7
        %v628 = vsub.s32 7, %v627
        %v629 = vrot.slane %v563, %v628
        %v774 = vunpack.c.l.b16 %v434
        %v775 = vunpack.c.h.b16 %v434
        %v776 = vunpack.c.l.b16 %v435
        %v777 = vunpack.c.h.b16 %v435
        %v778 = vunpack.c.l.b16 %v436
        %v779 = vunpack.c.h.b16 %v436
        %v780 = vunpack.c.l.b16 %v437
        %v781 = vunpack.c.h.b16 %v437
        %v782 = vunpack.c.l.b16 %v438
        %v783 = vunpack.c.h.b16 %v438
        %v784 = vunpack.c.l.b16 %v439
        %v785 = vunpack.c.h.b16 %v439
        %v786 = vunpack.c.l.b16 %v440
        %v787 = vunpack.c.h.b16 %v440
        %v788 = vunpack.c.l.b16 %v441
        %v789 = vunpack.c.h.b16 %v441
        %v790 = vunpack.c.l.b16 %v442
        %v791 = vunpack.c.h.b16 %v442
        %v792 = vunpack.c.l.b16 %v443
        %v793 = vunpack.c.h.b16 %v443
        %v794 = vunpack.c.l.b16 %v444
        %v795 = vunpack.c.h.b16 %v444
        %v796 = vunpack.c.l.b16 %v445
        %v797 = vunpack.c.h.b16 %v445
        %v798 = vunpack.c.l.b16 %v446
        %v799 = vunpack.c.h.b16 %v446
        %v800 = vunpack.c.l.b16 %v447
        %v801 = vunpack.c.h.b16 %v447
        %v802 = vunpack.c.l.b16 %v448
        %v803 = vunpack.c.h.b16 %v448
        %v804 = vunpack.c.l.b16 %v449
        %v805 = vunpack.c.h.b16 %v449
        %v806 = vunpack.c.l.b16 %v450
        %v807 = vunpack.c.h.b16 %v450
        %v808 = vunpack.c.l.b16 %v451
        %v809 = vunpack.c.h.b16 %v451
        %v810 = vunpack.c.l.b16 %v452
        %v811 = vunpack.c.h.b16 %v452
        %v812 = vunpack.c.l.b16 %v453
        %v813 = vunpack.c.h.b16 %v453
        %v814 = vunpack.c.l.b16 %v454
        %v815 = vunpack.c.h.b16 %v454
        %v816 = vunpack.c.l.b16 %v455
        %v817 = vunpack.c.h.b16 %v455
        %v818 = vunpack.c.l.b16 %v456
        %v819 = vunpack.c.h.b16 %v456
        %v820 = vunpack.c.l.b16 %v457
        %v821 = vunpack.c.h.b16 %v457
        %v822 = vunpack.c.l.b16 %v458
        %v823 = vunpack.c.h.b16 %v458
        %v824 = vunpack.c.l.b16 %v459
        %v825 = vunpack.c.h.b16 %v459
        %v826 = vunpack.c.l.b16 %v460
        %v827 = vunpack.c.h.b16 %v460
        %v828 = vunpack.c.l.b16 %v461
        %v829 = vunpack.c.h.b16 %v461
        %v830 = vunpack.c.l.b16 %v462
        %v831 = vunpack.c.h.b16 %v462
        %v832 = vunpack.c.l.b16 %v463
        %v833 = vunpack.c.h.b16 %v463
        %v834 = vunpack.c.l.b16 %v464
        %v835 = vunpack.c.h.b16 %v464
        %v836 = vunpack.c.l.b16 %v465
        %v837 = vunpack.c.h.b16 %v465
        %v838 = vunpack.c.l.b16 %v466
        %v839 = vunpack.c.h.b16 %v466
        %v840 = vunpack.c.l.b16 %v467
        %v841 = vunpack.c.h.b16 %v467
        %v842 = vunpack.c.l.b16 %v468
        %v843 = vunpack.c.h.b16 %v468
        %v844 = vunpack.c.l.b16 %v469
        %v845 = vunpack.c.h.b16 %v469
        %v846 = vunpack.c.l.b16 %v470
        %v847 = vunpack.c.h.b16 %v470
        %v848 = vunpack.c.l.b16 %v471
        %v849 = vunpack.c.h.b16 %v471
        %v850 = vunpack.c.l.b16 %v472
        %v851 = vunpack.c.h.b16 %v472
        %v852 = vunpack.c.l.b16 %v473
        %v853 = vunpack.c.h.b16 %v473
        %v854 = vunpack.c.l.b16 %v474
        %v855 = vunpack.c.h.b16 %v474
        %v856 = vunpack.c.l.b16 %v475
        %v857 = vunpack.c.h.b16 %v475
        %v858 = vunpack.c.l.b16 %v476
        %v859 = vunpack.c.h.b16 %v476
        %v860 = vunpack.c.l.b16 %v477
        %v861 = vunpack.c.h.b16 %v477
        %v862 = vunpack.c.l.b16 %v478
        %v863 = vunpack.c.h.b16 %v478
        %v864 = vunpack.c.l.b16 %v479
        %v865 = vunpack.c.h.b16 %v479
        %v866 = vunpack.c.l.b16 %v480
        %v867 = vunpack.c.h.b16 %v480
        %v868 = vunpack.c.l.b16 %v481
        %v869 = vunpack.c.h.b16 %v481
        %v870 = vunpack.c.l.b16 %v482
        %v871 = vunpack.c.h.b16 %v482
        %v872 = vunpack.c.l.b16 %v483
        %v873 = vunpack.c.h.b16 %v483
        %v874 = vunpack.c.l.b16 %v484
        %v875 = vunpack.c.h.b16 %v484
        %v876 = vunpack.c.l.b16 %v485
        %v877 = vunpack.c.h.b16 %v485
        %v878 = vunpack.c.l.b16 %v486
        %v879 = vunpack.c.h.b16 %v486
        %v880 = vunpack.c.l.b16 %v487
        %v881 = vunpack.c.h.b16 %v487
        %v882 = vunpack.c.l.b16 %v488
        %v883 = vunpack.c.h.b16 %v488
        %v884 = vunpack.c.l.b16 %v489
        %v885 = vunpack.c.h.b16 %v489
        %v886 = vunpack.c.l.b16 %v490
        %v887 = vunpack.c.h.b16 %v490
        %v888 = vunpack.c.l.b16 %v491
        %v889 = vunpack.c.h.b16 %v491
        %v890 = vunpack.c.l.b16 %v492
        %v891 = vunpack.c.h.b16 %v492
        %v892 = vunpack.c.l.b16 %v493
        %v893 = vunpack.c.h.b16 %v493
        %v894 = vunpack.c.l.b16 %v494
        %v895 = vunpack.c.h.b16 %v494
        %v896 = vunpack.c.l.b16 %v495
        %v897 = vunpack.c.h.b16 %v495
        %v898 = vunpack.c.l.b16 %v496
        %v899 = vunpack.c.h.b16 %v496
        %v900 = vunpack.c.l.b16 %v497
        %v901 = vunpack.c.h.b16 %v497
        %v902 = vunpack.c.l.b16 %v498
        %v903 = vunpack.c.h.b16 %v498
        %v904 = vunpack.c.l.b16 %v499
        %v905 = vunpack.c.h.b16 %v499
        %v906 = vunpack.c.l.b16 %v500
        %v907 = vunpack.c.h.b16 %v500
        %v908 = vunpack.c.l.b16 %v501
        %v909 = vunpack.c.h.b16 %v501
        %v910 = vunpack.c.l.b16 %v502
        %v911 = vunpack.c.h.b16 %v502
        %v912 = vunpack.c.l.b16 %v503
        %v913 = vunpack.c.h.b16 %v503
        %v914 = vunpack.c.l.b16 %v504
        %v915 = vunpack.c.h.b16 %v504
        %v916 = vunpack.c.l.b16 %v505
        %v917 = vunpack.c.h.b16 %v505
        %v918 = vunpack.c.l.b16 %v506
        %v919 = vunpack.c.h.b16 %v506
        %v920 = vunpack.c.l.b16 %v507
        %v921 = vunpack.c.h.b16 %v507
        %v922 = vunpack.c.l.b16 %v508
        %v923 = vunpack.c.h.b16 %v508
        %v924 = vunpack.c.l.b16 %v509
        %v925 = vunpack.c.h.b16 %v509
        %v926 = vunpack.c.l.b16 %v510
        %v927 = vunpack.c.h.b16 %v510
        %v928 = vunpack.c.l.b16 %v511
        %v929 = vunpack.c.h.b16 %v511
        %v930 = vunpack.c.l.b16 %v512
        %v931 = vunpack.c.h.b16 %v512
        %v932 = vunpack.c.l.b16 %v513
        %v933 = vunpack.c.h.b16 %v513
        %v934 = vunpack.c.l.b16 %v514
        %v935 = vunpack.c.h.b16 %v514
        %v936 = vunpack.c.l.b16 %v515
        %v937 = vunpack.c.h.b16 %v515
        %v938 = vunpack.c.l.b16 %v516
        %v939 = vunpack.c.h.b16 %v516
        %v940 = vunpack.c.l.b16 %v517
        %v941 = vunpack.c.h.b16 %v517
        %v942 = vunpack.c.l.b16 %v518
        %v943 = vunpack.c.h.b16 %v518
        %v944 = vunpack.c.l.b16 %v519
        %v945 = vunpack.c.h.b16 %v519
        %v946 = vunpack.c.l.b16 %v520
        %v947 = vunpack.c.h.b16 %v520
        %v948 = vunpack.c.l.b16 %v521
        %v949 = vunpack.c.h.b16 %v521
        %v950 = vunpack.c.l.b16 %v522
        %v951 = vunpack.c.h.b16 %v522
        %v952 = vunpack.c.l.b16 %v523
        %v953 = vunpack.c.h.b16 %v523
        %v954 = vunpack.c.l.b16 %v524
        %v955 = vunpack.c.h.b16 %v524
        %v956 = vunpack.c.l.b16 %v525
        %v957 = vunpack.c.h.b16 %v525
        %v958 = vunpack.c.l.b16 %v526
        %v959 = vunpack.c.h.b16 %v526
        %v960 = vunpack.c.l.b16 %v527
        %v961 = vunpack.c.h.b16 %v527
        %v962 = vunpack.c.l.b16 %v528
        %v963 = vunpack.c.h.b16 %v528
        %v964 = vunpack.c.l.b16 %v529
        %v965 = vunpack.c.h.b16 %v529
        %v966 = vunpack.c.l.b16 %v530
        %v967 = vunpack.c.h.b16 %v530
        %v968 = vunpack.c.l.b16 %v531
        %v969 = vunpack.c.h.b16 %v531
        %v970 = vunpack.c.l.b16 %v532
        %v971 = vunpack.c.h.b16 %v532
        %v972 = vunpack.c.l.b16 %v533
        %v973 = vunpack.c.h.b16 %v533
        %v974 = vunpack.c.l.b16 %v534
        %v975 = vunpack.c.h.b16 %v534
        %v976 = vunpack.c.l.b16 %v535
        %v977 = vunpack.c.h.b16 %v535
        %v978 = vunpack.c.l.b16 %v536
        %v979 = vunpack.c.h.b16 %v536
        %v980 = vunpack.c.l.b16 %v537
        %v981 = vunpack.c.h.b16 %v537
        %v982 = vunpack.c.l.b16 %v538
        %v983 = vunpack.c.h.b16 %v538
        %v984 = vunpack.c.l.b16 %v539
        %v985 = vunpack.c.h.b16 %v539
        %v986 = vunpack.c.l.b16 %v540
        %v987 = vunpack.c.h.b16 %v540
        %v988 = vunpack.c.l.b16 %v541
        %v989 = vunpack.c.h.b16 %v541
        %v990 = vunpack.c.l.b16 %v542
        %v991 = vunpack.c.h.b16 %v542
        %v992 = vunpack.c.l.b16 %v543
        %v993 = vunpack.c.h.b16 %v543
        %v994 = vunpack.c.l.b16 %v544
        %v995 = vunpack.c.h.b16 %v544
        %v996 = vunpack.c.l.b16 %v545
        %v997 = vunpack.c.h.b16 %v545
        %v998 = vunpack.c.l.b16 %v546
        %v999 = vunpack.c.h.b16 %v546
        %v1000 = vunpack.c.l.b16 %v547
        %v1001 = vunpack.c.h.b16 %v547
        %v1002 = vunpack.c.l.b16 %v548
        %v1003 = vunpack.c.h.b16 %v548
        %v1004 = vunpack.c.l.b16 %v549
        %v1005 = vunpack.c.h.b16 %v549
        %v1006 = vunpack.c.l.b16 %v550
        %v1007 = vunpack.c.h.b16 %v550
        %v1008 = vunpack.c.l.b16 %v551
        %v1009 = vunpack.c.h.b16 %v551
        %v1010 = vunpack.c.l.b16 %v552
        %v1011 = vunpack.c.h.b16 %v552
        %v1012 = vunpack.c.l.b16 %v553
        %v1013 = vunpack.c.h.b16 %v553
        %v1014 = vunpack.c.l.b16 %v554
        %v1015 = vunpack.c.h.b16 %v554
        %v1016 = vunpack.c.l.b16 %v555
        %v1017 = vunpack.c.h.b16 %v555
        %v1018 = vunpack.c.l.b16 %v556
        %v1019 = vunpack.c.h.b16 %v556
        %v1020 = vunpack.c.l.b16 %v557
        %v1021 = vunpack.c.h.b16 %v557
        %v1022 = vunpack.c.l.b16 %v558
        %v1023 = vunpack.c.h.b16 %v558
        %v1024 = vunpack.c.l.b16 %v559
        %v1025 = vunpack.c.h.b16 %v559
        %v1026 = vunpack.c.l.b16 %v560
        %v1027 = vunpack.c.h.b16 %v560
        %v1028 = vunpack.c.l.b16 %v561
        %v1029 = vunpack.c.h.b16 %v561
        %v1030 = vpack.c.b16 %v790, %v774
        %v1031 = vpack.c.b16 %v791, %v775
        %v1032 = vpack.c.b16 %v792, %v776
        %v1033 = vpack.c.b16 %v793, %v777
        %v1034 = vpack.c.b16 %v794, %v778
        %v1035 = vpack.c.b16 %v795, %v779
        %v1036 = vpack.c.b16 %v796, %v780
        %v1037 = vpack.c.b16 %v797, %v781
        %v1038 = vpack.c.b16 %v798, %v782
        %v1039 = vpack.c.b16 %v799, %v783
        %v1040 = vpack.c.b16 %v800, %v784
        %v1041 = vpack.c.b16 %v801, %v785
        %v1042 = vpack.c.b16 %v802, %v786
        %v1043 = vpack.c.b16 %v803, %v787
        %v1044 = vpack.c.b16 %v804, %v788
        %v1045 = vpack.c.b16 %v805, %v789
        %v1046 = vpack.c.b16 %v822, %v806
        %v1047 = vpack.c.b16 %v823, %v807
        %v1048 = vpack.c.b16 %v824, %v808
        %v1049 = vpack.c.b16 %v825, %v809
        %v1050 = vpack.c.b16 %v826, %v810
        %v1051 = vpack.c.b16 %v827, %v811
        %v1052 = vpack.c.b16 %v828, %v812
        %v1053 = vpack.c.b16 %v829, %v813
        %v1054 = vpack.c.b16 %v830, %v814
        %v1055 = vpack.c.b16 %v831, %v815
        %v1056 = vpack.c.b16 %v832, %v816
        %v1057 = vpack.c.b16 %v833, %v817
        %v1058 = vpack.c.b16 %v834, %v818
        %v1059 = vpack.c.b16 %v835, %v819
        %v1060 = vpack.c.b16 %v836, %v820
        %v1061 = vpack.c.b16 %v837, %v821
        %v1062 = vpack.c.b16 %v854, %v838
        %v1063 = vpack.c.b16 %v855, %v839
        %v1064 = vpack.c.b16 %v856, %v840
        %v1065 = vpack.c.b16 %v857, %v841
        %v1066 = vpack.c.b16 %v858, %v842
        %v1067 = vpack.c.b16 %v859, %v843
        %v1068 = vpack.c.b16 %v860, %v844
        %v1069 = vpack.c.b16 %v861, %v845
        %v1070 = vpack.c.b16 %v862, %v846
        %v1071 = vpack.c.b16 %v863, %v847
        %v1072 = vpack.c.b16 %v864, %v848
        %v1073 = vpack.c.b16 %v865, %v849
        %v1074 = vpack.c.b16 %v866, %v850
        %v1075 = vpack.c.b16 %v867, %v851
        %v1076 = vpack.c.b16 %v868, %v852
        %v1077 = vpack.c.b16 %v869, %v853
        %v1078 = vpack.c.b16 %v886, %v870
        %v1079 = vpack.c.b16 %v887, %v871
        %v1080 = vpack.c.b16 %v888, %v872
        %v1081 = vpack.c.b16 %v889, %v873
        %v1082 = vpack.c.b16 %v890, %v874
        %v1083 = vpack.c.b16 %v891, %v875
        %v1084 = vpack.c.b16 %v892, %v876
        %v1085 = vpack.c.b16 %v893, %v877
        %v1086 = vpack.c.b16 %v894, %v878
        %v1087 = vpack.c.b16 %v895, %v879
        %v1088 = vpack.c.b16 %v896, %v880
        %v1089 = vpack.c.b16 %v897, %v881
        %v1090 = vpack.c.b16 %v898, %v882
        %v1091 = vpack.c.b16 %v899, %v883
        %v1092 = vpack.c.b16 %v900, %v884
        %v1093 = vpack.c.b16 %v901, %v885
        %v1094 = vpack.c.b16 %v918, %v902
        %v1095 = vpack.c.b16 %v919, %v903
        %v1096 = vpack.c.b16 %v920, %v904
        %v1097 = vpack.c.b16 %v921, %v905
        %v1098 = vpack.c.b16 %v922, %v906
        %v1099 = vpack.c.b16 %v923, %v907
        %v1100 = vpack.c.b16 %v924, %v908
        %v1101 = vpack.c.b16 %v925, %v909
        %v1102 = vpack.c.b16 %v926, %v910
        %v1103 = vpack.c.b16 %v927, %v911
        %v1104 = vpack.c.b16 %v928, %v912
        %v1105 = vpack.c.b16 %v929, %v913
        %v1106 = vpack.c.b16 %v930, %v914
        %v1107 = vpack.c.b16 %v931, %v915
        %v1108 = vpack.c.b16 %v932, %v916
        %v1109 = vpack.c.b16 %v933, %v917
        %v1110 = vpack.c.b16 %v950, %v934
        %v1111 = vpack.c.b16 %v951, %v935
        %v1112 = vpack.c.b16 %v952, %v936
        %v1113 = vpack.c.b16 %v953, %v937
        %v1114 = vpack.c.b16 %v954, %v938
        %v1115 = vpack.c.b16 %v955, %v939
        %v1116 = vpack.c.b16 %v956, %v940
        %v1117 = vpack.c.b16 %v957, %v941
        %v1118 = vpack.c.b16 %v958, %v942
        %v1119 = vpack.c.b16 %v959, %v943
        %v1120 = vpack.c.b16 %v960, %v944
        %v1121 = vpack.c.b16 %v961, %v945
        %v1122 = vpack.c.b16 %v962, %v946
        %v1123 = vpack.c.b16 %v963, %v947
        %v1124 = vpack.c.b16 %v964, %v948
        %v1125 = vpack.c.b16 %v965, %v949
        %v1126 = vpack.c.b16 %v982, %v966
        %v1127 = vpack.c.b16 %v983, %v967
        %v1128 = vpack.c.b16 %v984, %v968
        %v1129 = vpack.c.b16 %v985, %v969
        %v1130 = vpack.c.b16 %v986, %v970
        %v1131 = vpack.c.b16 %v987, %v971
        %v1132 = vpack.c.b16 %v988, %v972
        %v1133 = vpack.c.b16 %v989, %v973
        %v1134 = vpack.c.b16 %v990, %v974
        %v1135 = vpack.c.b16 %v991, %v975
        %v1136 = vpack.c.b16 %v992, %v976
        %v1137 = vpack.c.b16 %v993, %v977
        %v1138 = vpack.c.b16 %v994, %v978
        %v1139 = vpack.c.b16 %v995, %v979
        %v1140 = vpack.c.b16 %v996, %v980
        %v1141 = vpack.c.b16 %v997, %v981
        %v1142 = vpack.c.b16 %v1014, %v998
        %v1143 = vpack.c.b16 %v1015, %v999
        %v1144 = vpack.c.b16 %v1016, %v1000
        %v1145 = vpack.c.b16 %v1017, %v1001
        %v1146 = vpack.c.b16 %v1018, %v1002
        %v1147 = vpack.c.b16 %v1019, %v1003
        %v1148 = vpack.c.b16 %v1020, %v1004
        %v1149 = vpack.c.b16 %v1021, %v1005
        %v1150 = vpack.c.b16 %v1022, %v1006
        %v1151 = vpack.c.b16 %v1023, %v1007
        %v1152 = vpack.c.b16 %v1024, %v1008
        %v1153 = vpack.c.b16 %v1025, %v1009
        %v1154 = vpack.c.b16 %v1026, %v1010
        %v1155 = vpack.c.b16 %v1027, %v1011
        %v1156 = vpack.c.b16 %v1028, %v1012
        %v1157 = vpack.c.b16 %v1029, %v1013
        %1286 = vmatprep.subr.bf16.mxu0 %v1031
        %1287 = vmatpush1.bf16.msra.mxu0 %v1030
        %1288 = vmatprep.subr.bf16.mxu0 %v1047
        %1289 = vmatpush1.bf16.msra.mxu0 %v1046
        %1290 = vmatprep.subr.bf16.mxu0 %v1063
        %1291 = vmatpush1.bf16.msra.mxu0 %v1062
        %1292 = vmatprep.subr.bf16.mxu0 %v1079
        %1293 = vmatpush1.bf16.msra.mxu0 %v1078
        %1294 = vmatprep.subr.bf16.mxu0 %v1095
        %1295 = vmatpush1.bf16.msra.mxu0 %v1094
        %1296 = vmatprep.subr.bf16.mxu0 %v1111
        %1297 = vmatpush1.bf16.msra.mxu0 %v1110
        %1298 = vmatprep.subr.bf16.mxu0 %v1127
        %1299 = vmatpush1.bf16.msra.mxu0 %v1126
        %1300 = vmatprep.subr.bf16.mxu0 %v1143
        %1301 = vmatpush1.bf16.msra.mxu0 %v1142
        %1302 = vmatprep.subr.bf16.mxu0 0
        %1303 = vmatpush1.bf16.msra.mxu0 0
        %1304 = vmatprep.subr.bf16.mxu0 0
        %1305 = vmatpush1.bf16.msra.mxu0 0
        %1306 = vmatprep.subr.bf16.mxu0 0
        %1307 = vmatpush1.bf16.msra.mxu0 0
        %1308 = vmatprep.subr.bf16.mxu0 0
        %1309 = vmatpush1.bf16.msra.mxu0 0
        %1310 = vmatprep.subr.bf16.mxu0 0
        %1311 = vmatpush1.bf16.msra.mxu0 0
        %1312 = vmatprep.subr.bf16.mxu0 0
        %1313 = vmatpush1.bf16.msra.mxu0 0
        %1314 = vmatprep.subr.bf16.mxu0 0
        %1315 = vmatpush1.bf16.msra.mxu0 0
        %1316 = vmatprep.subr.bf16.mxu0 0
        %1317 = vmatpush1.bf16.msra.mxu0 0
        %1318 = vmatprep.mubr.bf16.mxu0 0
        %1319 = vmatmul.mubr.bf16.gmra.mrb[0].mxu0 %v432
        %v1320 = vpop.f32.mrb[0].mxu0
        %v1321 = vadd.f32 %v569, %v1320
        %v1322 = vpop.f32.mrb[0].mxu0
        %v1323 = vadd.f32 %v573, %v1322
        %v1324 = vpop.f32.mrb[0].mxu0
        %v1325 = vadd.f32 %v569, %v1324
        %v1326 = vpop.f32.mrb[0].mxu0
        %v1327 = vadd.f32 %v573, %v1326
        %1328 = vmatprep.mubr.bf16.mxu0 0
        %1329 = vmatmul.mubr.bf16.gmra.mrb[0].mxu0 %v433
        %v1330 = vpop.f32.mrb[0].mxu0
        %v1331 = vadd.f32 %v569, %v1330
        %v1332 = vpop.f32.mrb[0].mxu0
        %v1333 = vadd.f32 %v573, %v1332
        %v1334 = vpop.f32.mrb[0].mxu0
        %v1335 = vadd.f32 %v569, %v1334
        %v1336 = vpop.f32.mrb[0].mxu0
        %v1337 = vadd.f32 %v573, %v1336
        %1338 = vdwg.mxu0
        %1339 = vmatprep.subr.bf16.mxu0 %v1033
        %1340 = vmatpush1.bf16.msra.mxu0 %v1032
        %1341 = vmatprep.subr.bf16.mxu0 %v1049
        %1342 = vmatpush1.bf16.msra.mxu0 %v1048
        %1343 = vmatprep.subr.bf16.mxu0 %v1065
        %1344 = vmatpush1.bf16.msra.mxu0 %v1064
        %1345 = vmatprep.subr.bf16.mxu0 %v1081
        %1346 = vmatpush1.bf16.msra.mxu0 %v1080
        %1347 = vmatprep.subr.bf16.mxu0 %v1097
        %1348 = vmatpush1.bf16.msra.mxu0 %v1096
        %1349 = vmatprep.subr.bf16.mxu0 %v1113
        %1350 = vmatpush1.bf16.msra.mxu0 %v1112
        %1351 = vmatprep.subr.bf16.mxu0 %v1129
        %1352 = vmatpush1.bf16.msra.mxu0 %v1128
        %1353 = vmatprep.subr.bf16.mxu0 %v1145
        %1354 = vmatpush1.bf16.msra.mxu0 %v1144
        %1355 = vmatprep.subr.bf16.mxu0 0
        %1356 = vmatpush1.bf16.msra.mxu0 0
        %1357 = vmatprep.subr.bf16.mxu0 0
        %1358 = vmatpush1.bf16.msra.mxu0 0
        %1359 = vmatprep.subr.bf16.mxu0 0
        %1360 = vmatpush1.bf16.msra.mxu0 0
        %1361 = vmatprep.subr.bf16.mxu0 0
        %1362 = vmatpush1.bf16.msra.mxu0 0
        %1363 = vmatprep.subr.bf16.mxu0 0
        %1364 = vmatpush1.bf16.msra.mxu0 0
        %1365 = vmatprep.subr.bf16.mxu0 0
        %1366 = vmatpush1.bf16.msra.mxu0 0
        %1367 = vmatprep.subr.bf16.mxu0 0
        %1368 = vmatpush1.bf16.msra.mxu0 0
        %1369 = vmatprep.subr.bf16.mxu0 0
        %1370 = vmatpush1.bf16.msra.mxu0 0
        %1371 = vmatprep.mubr.bf16.mxu0 0
        %1372 = vmatmul.mubr.bf16.gmra.mrb[0].mxu0 %v432
        %v1373 = vpop.f32.mrb[0].mxu0
        %v1374 = vadd.f32 %v577, %v1373
        %v1375 = vpop.f32.mrb[0].mxu0
        %v1376 = vadd.f32 %v581, %v1375
        %v1377 = vpop.f32.mrb[0].mxu0
        %v1378 = vadd.f32 %v577, %v1377
        %v1379 = vpop.f32.mrb[0].mxu0
        %v1380 = vadd.f32 %v581, %v1379
        %1381 = vmatprep.mubr.bf16.mxu0 0
        %1382 = vmatmul.mubr.bf16.gmra.mrb[0].mxu0 %v433
        %v1383 = vpop.f32.mrb[0].mxu0
        %v1384 = vadd.f32 %v577, %v1383
        %v1385 = vpop.f32.mrb[0].mxu0
        %v1386 = vadd.f32 %v581, %v1385
        %v1387 = vpop.f32.mrb[0].mxu0
        %v1388 = vadd.f32 %v577, %v1387
        %v1389 = vpop.f32.mrb[0].mxu0
        %v1390 = vadd.f32 %v581, %v1389
        %1391 = vdwg.mxu0
        %1392 = vmatprep.subr.bf16.mxu0 %v1035
        %1393 = vmatpush1.bf16.msra.mxu0 %v1034
        %1394 = vmatprep.subr.bf16.mxu0 %v1051
        %1395 = vmatpush1.bf16.msra.mxu0 %v1050
        %1396 = vmatprep.subr.bf16.mxu0 %v1067
        %1397 = vmatpush1.bf16.msra.mxu0 %v1066
        %1398 = vmatprep.subr.bf16.mxu0 %v1083
        %1399 = vmatpush1.bf16.msra.mxu0 %v1082
        %1400 = vmatprep.subr.bf16.mxu0 %v1099
        %1401 = vmatpush1.bf16.msra.mxu0 %v1098
        %1402 = vmatprep.subr.bf16.mxu0 %v1115
        %1403 = vmatpush1.bf16.msra.mxu0 %v1114
        %1404 = vmatprep.subr.bf16.mxu0 %v1131
        %1405 = vmatpush1.bf16.msra.mxu0 %v1130
        %1406 = vmatprep.subr.bf16.mxu0 %v1147
        %1407 = vmatpush1.bf16.msra.mxu0 %v1146
        %1408 = vmatprep.subr.bf16.mxu0 0
        %1409 = vmatpush1.bf16.msra.mxu0 0
        %1410 = vmatprep.subr.bf16.mxu0 0
        %1411 = vmatpush1.bf16.msra.mxu0 0
        %1412 = vmatprep.subr.bf16.mxu0 0
        %1413 = vmatpush1.bf16.msra.mxu0 0
        %1414 = vmatprep.subr.bf16.mxu0 0
        %1415 = vmatpush1.bf16.msra.mxu0 0
        %1416 = vmatprep.subr.bf16.mxu0 0
        %1417 = vmatpush1.bf16.msra.mxu0 0
        %1418 = vmatprep.subr.bf16.mxu0 0
        %1419 = vmatpush1.bf16.msra.mxu0 0
        %1420 = vmatprep.subr.bf16.mxu0 0
        %1421 = vmatpush1.bf16.msra.mxu0 0
        %1422 = vmatprep.subr.bf16.mxu0 0
        %1423 = vmatpush1.bf16.msra.mxu0 0
        %1424 = vmatprep.mubr.bf16.mxu0 0
        %1425 = vmatmul.mubr.bf16.gmra.mrb[0].mxu0 %v432
        %v1426 = vpop.f32.mrb[0].mxu0
        %v1427 = vadd.f32 %v585, %v1426
        %v1428 = vpop.f32.mrb[0].mxu0
        %v1429 = vadd.f32 %v589, %v1428
        %v1430 = vpop.f32.mrb[0].mxu0
        %v1431 = vadd.f32 %v585, %v1430
        %v1432 = vpop.f32.mrb[0].mxu0
        %v1433 = vadd.f32 %v589, %v1432
        %1434 = vmatprep.mubr.bf16.mxu0 0
        %1435 = vmatmul.mubr.bf16.gmra.mrb[0].mxu0 %v433
        %v1436 = vpop.f32.mrb[0].mxu0
        %v1437 = vadd.f32 %v585, %v1436
        %v1438 = vpop.f32.mrb[0].mxu0
        %v1439 = vadd.f32 %v589, %v1438
        %v1440 = vpop.f32.mrb[0].mxu0
        %v1441 = vadd.f32 %v585, %v1440
        %v1442 = vpop.f32.mrb[0].mxu0
        %v1443 = vadd.f32 %v589, %v1442
        %1444 = vdwg.mxu0
        %1445 = vmatprep.subr.bf16.mxu0 %v1037
        %1446 = vmatpush1.bf16.msra.mxu0 %v1036
        %1447 = vmatprep.subr.bf16.mxu0 %v1053
        %1448 = vmatpush1.bf16.msra.mxu0 %v1052
        %1449 = vmatprep.subr.bf16.mxu0 %v1069
        %1450 = vmatpush1.bf16.msra.mxu0 %v1068
        %1451 = vmatprep.subr.bf16.mxu0 %v1085
        %1452 = vmatpush1.bf16.msra.mxu0 %v1084
        %1453 = vmatprep.subr.bf16.mxu0 %v1101
        %1454 = vmatpush1.bf16.msra.mxu0 %v1100
        %1455 = vmatprep.subr.bf16.mxu0 %v1117
        %1456 = vmatpush1.bf16.msra.mxu0 %v1116
        %1457 = vmatprep.subr.bf16.mxu0 %v1133
        %1458 = vmatpush1.bf16.msra.mxu0 %v1132
        %1459 = vmatprep.subr.bf16.mxu0 %v1149
        %1460 = vmatpush1.bf16.msra.mxu0 %v1148
        %1461 = vmatprep.subr.bf16.mxu0 0
        %1462 = vmatpush1.bf16.msra.mxu0 0
        %1463 = vmatprep.subr.bf16.mxu0 0
        %1464 = vmatpush1.bf16.msra.mxu0 0
        %1465 = vmatprep.subr.bf16.mxu0 0
        %1466 = vmatpush1.bf16.msra.mxu0 0
        %1467 = vmatprep.subr.bf16.mxu0 0
        %1468 = vmatpush1.bf16.msra.mxu0 0
        %1469 = vmatprep.subr.bf16.mxu0 0
        %1470 = vmatpush1.bf16.msra.mxu0 0
        %1471 = vmatprep.subr.bf16.mxu0 0
        %1472 = vmatpush1.bf16.msra.mxu0 0
        %1473 = vmatprep.subr.bf16.mxu0 0
        %1474 = vmatpush1.bf16.msra.mxu0 0
        %1475 = vmatprep.subr.bf16.mxu0 0
        %1476 = vmatpush1.bf16.msra.mxu0 0
        %1477 = vmatprep.mubr.bf16.mxu0 0
        %1478 = vmatmul.mubr.bf16.gmra.mrb[0].mxu0 %v432
        %v1479 = vpop.f32.mrb[0].mxu0
        %v1480 = vadd.f32 %v593, %v1479
        %v1481 = vpop.f32.mrb[0].mxu0
        %v1482 = vadd.f32 %v597, %v1481
        %v1483 = vpop.f32.mrb[0].mxu0
        %v1484 = vadd.f32 %v593, %v1483
        %v1485 = vpop.f32.mrb[0].mxu0
        %v1486 = vadd.f32 %v597, %v1485
        %1487 = vmatprep.mubr.bf16.mxu0 0
        %1488 = vmatmul.mubr.bf16.gmra.mrb[0].mxu0 %v433
        %v1489 = vpop.f32.mrb[0].mxu0
        %v1490 = vadd.f32 %v593, %v1489
        %v1491 = vpop.f32.mrb[0].mxu0
        %v1492 = vadd.f32 %v597, %v1491
        %v1493 = vpop.f32.mrb[0].mxu0
        %v1494 = vadd.f32 %v593, %v1493
        %v1495 = vpop.f32.mrb[0].mxu0
        %v1496 = vadd.f32 %v597, %v1495
        %1497 = vdwg.mxu0
        %1498 = vmatprep.subr.bf16.mxu0 %v1039
        %1499 = vmatpush1.bf16.msra.mxu0 %v1038
        %1500 = vmatprep.subr.bf16.mxu0 %v1055
        %1501 = vmatpush1.bf16.msra.mxu0 %v1054
        %1502 = vmatprep.subr.bf16.mxu0 %v1071
        %1503 = vmatpush1.bf16.msra.mxu0 %v1070
        %1504 = vmatprep.subr.bf16.mxu0 %v1087
        %1505 = vmatpush1.bf16.msra.mxu0 %v1086
        %1506 = vmatprep.subr.bf16.mxu0 %v1103
        %1507 = vmatpush1.bf16.msra.mxu0 %v1102
        %1508 = vmatprep.subr.bf16.mxu0 %v1119
        %1509 = vmatpush1.bf16.msra.mxu0 %v1118
        %1510 = vmatprep.subr.bf16.mxu0 %v1135
        %1511 = vmatpush1.bf16.msra.mxu0 %v1134
        %1512 = vmatprep.subr.bf16.mxu0 %v1151
        %1513 = vmatpush1.bf16.msra.mxu0 %v1150
        %1514 = vmatprep.subr.bf16.mxu0 0
        %1515 = vmatpush1.bf16.msra.mxu0 0
        %1516 = vmatprep.subr.bf16.mxu0 0
        %1517 = vmatpush1.bf16.msra.mxu0 0
        %1518 = vmatprep.subr.bf16.mxu0 0
        %1519 = vmatpush1.bf16.msra.mxu0 0
        %1520 = vmatprep.subr.bf16.mxu0 0
        %1521 = vmatpush1.bf16.msra.mxu0 0
        %1522 = vmatprep.subr.bf16.mxu0 0
        %1523 = vmatpush1.bf16.msra.mxu0 0
        %1524 = vmatprep.subr.bf16.mxu0 0
        %1525 = vmatpush1.bf16.msra.mxu0 0
        %1526 = vmatprep.subr.bf16.mxu0 0
        %1527 = vmatpush1.bf16.msra.mxu0 0
        %1528 = vmatprep.subr.bf16.mxu0 0
        %1529 = vmatpush1.bf16.msra.mxu0 0
        %1530 = vmatprep.mubr.bf16.mxu0 0
        %1531 = vmatmul.mubr.bf16.gmra.mrb[0].mxu0 %v432
        %v1532 = vpop.f32.mrb[0].mxu0
        %v1533 = vadd.f32 %v601, %v1532
        %v1534 = vpop.f32.mrb[0].mxu0
        %v1535 = vadd.f32 %v605, %v1534
        %v1536 = vpop.f32.mrb[0].mxu0
        %v1537 = vadd.f32 %v601, %v1536
        %v1538 = vpop.f32.mrb[0].mxu0
        %v1539 = vadd.f32 %v605, %v1538
        %1540 = vmatprep.mubr.bf16.mxu0 0
        %1541 = vmatmul.mubr.bf16.gmra.mrb[0].mxu0 %v433
        %v1542 = vpop.f32.mrb[0].mxu0
        %v1543 = vadd.f32 %v601, %v1542
        %v1544 = vpop.f32.mrb[0].mxu0
        %v1545 = vadd.f32 %v605, %v1544
        %v1546 = vpop.f32.mrb[0].mxu0
        %v1547 = vadd.f32 %v601, %v1546
        %v1548 = vpop.f32.mrb[0].mxu0
        %v1549 = vadd.f32 %v605, %v1548
        %1550 = vdwg.mxu0
        %1551 = vmatprep.subr.bf16.mxu0 %v1041
        %1552 = vmatpush1.bf16.msra.mxu0 %v1040
        %1553 = vmatprep.subr.bf16.mxu0 %v1057
        %1554 = vmatpush1.bf16.msra.mxu0 %v1056
        %1555 = vmatprep.subr.bf16.mxu0 %v1073
        %1556 = vmatpush1.bf16.msra.mxu0 %v1072
        %1557 = vmatprep.subr.bf16.mxu0 %v1089
        %1558 = vmatpush1.bf16.msra.mxu0 %v1088
        %1559 = vmatprep.subr.bf16.mxu0 %v1105
        %1560 = vmatpush1.bf16.msra.mxu0 %v1104
        %1561 = vmatprep.subr.bf16.mxu0 %v1121
        %1562 = vmatpush1.bf16.msra.mxu0 %v1120
        %1563 = vmatprep.subr.bf16.mxu0 %v1137
        %1564 = vmatpush1.bf16.msra.mxu0 %v1136
        %1565 = vmatprep.subr.bf16.mxu0 %v1153
        %1566 = vmatpush1.bf16.msra.mxu0 %v1152
        %1567 = vmatprep.subr.bf16.mxu0 0
        %1568 = vmatpush1.bf16.msra.mxu0 0
        %1569 = vmatprep.subr.bf16.mxu0 0
        %1570 = vmatpush1.bf16.msra.mxu0 0
        %1571 = vmatprep.subr.bf16.mxu0 0
        %1572 = vmatpush1.bf16.msra.mxu0 0
        %1573 = vmatprep.subr.bf16.mxu0 0
        %1574 = vmatpush1.bf16.msra.mxu0 0
        %1575 = vmatprep.subr.bf16.mxu0 0
        %1576 = vmatpush1.bf16.msra.mxu0 0
        %1577 = vmatprep.subr.bf16.mxu0 0
        %1578 = vmatpush1.bf16.msra.mxu0 0
        %1579 = vmatprep.subr.bf16.mxu0 0
        %1580 = vmatpush1.bf16.msra.mxu0 0
        %1581 = vmatprep.subr.bf16.mxu0 0
        %1582 = vmatpush1.bf16.msra.mxu0 0
        %1583 = vmatprep.mubr.bf16.mxu0 0
        %1584 = vmatmul.mubr.bf16.gmra.mrb[0].mxu0 %v432
        %v1585 = vpop.f32.mrb[0].mxu0
        %v1586 = vadd.f32 %v609, %v1585
        %v1587 = vpop.f32.mrb[0].mxu0
        %v1588 = vadd.f32 %v613, %v1587
        %v1589 = vpop.f32.mrb[0].mxu0
        %v1590 = vadd.f32 %v609, %v1589
        %v1591 = vpop.f32.mrb[0].mxu0
        %v1592 = vadd.f32 %v613, %v1591
        %1593 = vmatprep.mubr.bf16.mxu0 0
        %1594 = vmatmul.mubr.bf16.gmra.mrb[0].mxu0 %v433
        %v1595 = vpop.f32.mrb[0].mxu0
        %v1596 = vadd.f32 %v609, %v1595
        %v1597 = vpop.f32.mrb[0].mxu0
        %v1598 = vadd.f32 %v613, %v1597
        %v1599 = vpop.f32.mrb[0].mxu0
        %v1600 = vadd.f32 %v609, %v1599
        %v1601 = vpop.f32.mrb[0].mxu0
        %v1602 = vadd.f32 %v613, %v1601
        %1603 = vdwg.mxu0
        %1604 = vmatprep.subr.bf16.mxu0 %v1043
        %1605 = vmatpush1.bf16.msra.mxu0 %v1042
        %1606 = vmatprep.subr.bf16.mxu0 %v1059
        %1607 = vmatpush1.bf16.msra.mxu0 %v1058
        %1608 = vmatprep.subr.bf16.mxu0 %v1075
        %1609 = vmatpush1.bf16.msra.mxu0 %v1074
        %1610 = vmatprep.subr.bf16.mxu0 %v1091
        %1611 = vmatpush1.bf16.msra.mxu0 %v1090
        %1612 = vmatprep.subr.bf16.mxu0 %v1107
        %1613 = vmatpush1.bf16.msra.mxu0 %v1106
        %1614 = vmatprep.subr.bf16.mxu0 %v1123
        %1615 = vmatpush1.bf16.msra.mxu0 %v1122
        %1616 = vmatprep.subr.bf16.mxu0 %v1139
        %1617 = vmatpush1.bf16.msra.mxu0 %v1138
        %1618 = vmatprep.subr.bf16.mxu0 %v1155
        %1619 = vmatpush1.bf16.msra.mxu0 %v1154
        %1620 = vmatprep.subr.bf16.mxu0 0
        %1621 = vmatpush1.bf16.msra.mxu0 0
        %1622 = vmatprep.subr.bf16.mxu0 0
        %1623 = vmatpush1.bf16.msra.mxu0 0
        %1624 = vmatprep.subr.bf16.mxu0 0
        %1625 = vmatpush1.bf16.msra.mxu0 0
        %1626 = vmatprep.subr.bf16.mxu0 0
        %1627 = vmatpush1.bf16.msra.mxu0 0
        %1628 = vmatprep.subr.bf16.mxu0 0
        %1629 = vmatpush1.bf16.msra.mxu0 0
        %1630 = vmatprep.subr.bf16.mxu0 0
        %1631 = vmatpush1.bf16.msra.mxu0 0
        %1632 = vmatprep.subr.bf16.mxu0 0
        %1633 = vmatpush1.bf16.msra.mxu0 0
        %1634 = vmatprep.subr.bf16.mxu0 0
        %1635 = vmatpush1.bf16.msra.mxu0 0
        %1636 = vmatprep.mubr.bf16.mxu0 0
        %1637 = vmatmul.mubr.bf16.gmra.mrb[0].mxu0 %v432
        %v1638 = vpop.f32.mrb[0].mxu0
        %v1639 = vadd.f32 %v617, %v1638
        %v1640 = vpop.f32.mrb[0].mxu0
        %v1641 = vadd.f32 %v621, %v1640
        %v1642 = vpop.f32.mrb[0].mxu0
        %v1643 = vadd.f32 %v617, %v1642
        %v1644 = vpop.f32.mrb[0].mxu0
        %v1645 = vadd.f32 %v621, %v1644
        %1646 = vmatprep.mubr.bf16.mxu0 0
        %1647 = vmatmul.mubr.bf16.gmra.mrb[0].mxu0 %v433
        %v1648 = vpop.f32.mrb[0].mxu0
        %v1649 = vadd.f32 %v617, %v1648
        %v1650 = vpop.f32.mrb[0].mxu0
        %v1651 = vadd.f32 %v621, %v1650
        %v1652 = vpop.f32.mrb[0].mxu0
        %v1653 = vadd.f32 %v617, %v1652
        %v1654 = vpop.f32.mrb[0].mxu0
        %v1655 = vadd.f32 %v621, %v1654
        %1656 = vdwg.mxu0
        %1657 = vmatprep.subr.bf16.mxu0 %v1045
        %1658 = vmatpush1.bf16.msra.mxu0 %v1044
        %1659 = vmatprep.subr.bf16.mxu0 %v1061
        %1660 = vmatpush1.bf16.msra.mxu0 %v1060
        %1661 = vmatprep.subr.bf16.mxu0 %v1077
        %1662 = vmatpush1.bf16.msra.mxu0 %v1076
        %1663 = vmatprep.subr.bf16.mxu0 %v1093
        %1664 = vmatpush1.bf16.msra.mxu0 %v1092
        %1665 = vmatprep.subr.bf16.mxu0 %v1109
        %1666 = vmatpush1.bf16.msra.mxu0 %v1108
        %1667 = vmatprep.subr.bf16.mxu0 %v1125
        %1668 = vmatpush1.bf16.msra.mxu0 %v1124
        %1669 = vmatprep.subr.bf16.mxu0 %v1141
        %1670 = vmatpush1.bf16.msra.mxu0 %v1140
        %1671 = vmatprep.subr.bf16.mxu0 %v1157
        %1672 = vmatpush1.bf16.msra.mxu0 %v1156
        %1673 = vmatprep.subr.bf16.mxu0 0
        %1674 = vmatpush1.bf16.msra.mxu0 0
        %1675 = vmatprep.subr.bf16.mxu0 0
        %1676 = vmatpush1.bf16.msra.mxu0 0
        %1677 = vmatprep.subr.bf16.mxu0 0
        %1678 = vmatpush1.bf16.msra.mxu0 0
        %1679 = vmatprep.subr.bf16.mxu0 0
        %1680 = vmatpush1.bf16.msra.mxu0 0
        %1681 = vmatprep.subr.bf16.mxu0 0
        %1682 = vmatpush1.bf16.msra.mxu0 0
        %1683 = vmatprep.subr.bf16.mxu0 0
        %1684 = vmatpush1.bf16.msra.mxu0 0
        %1685 = vmatprep.subr.bf16.mxu0 0
        %1686 = vmatpush1.bf16.msra.mxu0 0
        %1687 = vmatprep.subr.bf16.mxu0 0
        %1688 = vmatpush1.bf16.msra.mxu0 0
        %1689 = vmatprep.mubr.bf16.mxu0 0
        %1690 = vmatmul.mubr.bf16.gmra.mrb[0].mxu0 %v432
        %v1691 = vpop.f32.mrb[0].mxu0
        %v1692 = vadd.f32 %v625, %v1691
        %v1693 = vpop.f32.mrb[0].mxu0
        %v1694 = vadd.f32 %v629, %v1693
        %v1695 = vpop.f32.mrb[0].mxu0
        %v1696 = vadd.f32 %v625, %v1695
        %v1697 = vpop.f32.mrb[0].mxu0
        %v1698 = vadd.f32 %v629, %v1697
        %1699 = vmatprep.mubr.bf16.mxu0 0
        %1700 = vmatmul.mubr.bf16.gmra.mrb[0].mxu0 %v433
        %v1701 = vpop.f32.mrb[0].mxu0
        %v1702 = vadd.f32 %v625, %v1701
        %v1703 = vpop.f32.mrb[0].mxu0
        %v1704 = vadd.f32 %v629, %v1703
        %v1705 = vpop.f32.mrb[0].mxu0
        %v1706 = vadd.f32 %v625, %v1705
        %v1707 = vpop.f32.mrb[0].mxu0
        %v1708 = vadd.f32 %v629, %v1707
        %1709 = vdwg.mxu0
        %v1710 = vmax.f32 %v1321, 0.0
        %v1711 = vmax.f32 %v1323, 0.0
        %v1712 = vmax.f32 %v1374, 0.0
        %v1713 = vmax.f32 %v1376, 0.0
        %v1714 = vmax.f32 %v1427, 0.0
        %v1715 = vmax.f32 %v1429, 0.0
        %v1716 = vmax.f32 %v1480, 0.0
        %v1717 = vmax.f32 %v1482, 0.0
        %v1718 = vmax.f32 %v1533, 0.0
        %v1719 = vmax.f32 %v1535, 0.0
        %v1720 = vmax.f32 %v1586, 0.0
        %v1721 = vmax.f32 %v1588, 0.0
        %v1722 = vmax.f32 %v1639, 0.0
        %v1723 = vmax.f32 %v1641, 0.0
        %v1724 = vmax.f32 %v1692, 0.0
        %v1725 = vmax.f32 %v1694, 0.0
        %v1726 = vmax.f32 %v1325, 0.0
        %v1727 = vmax.f32 %v1327, 0.0
        %v1728 = vmax.f32 %v1378, 0.0
        %v1729 = vmax.f32 %v1380, 0.0
        %v1730 = vmax.f32 %v1431, 0.0
        %v1731 = vmax.f32 %v1433, 0.0
        %v1732 = vmax.f32 %v1484, 0.0
        %v1733 = vmax.f32 %v1486, 0.0
        %v1734 = vmax.f32 %v1537, 0.0
        %v1735 = vmax.f32 %v1539, 0.0
        %v1736 = vmax.f32 %v1590, 0.0
        %v1737 = vmax.f32 %v1592, 0.0
        %v1738 = vmax.f32 %v1643, 0.0
        %v1739 = vmax.f32 %v1645, 0.0
        %v1740 = vmax.f32 %v1696, 0.0
        %v1741 = vmax.f32 %v1698, 0.0
        %v1742 = vmax.f32 %v1331, 0.0
        %v1743 = vmax.f32 %v1333, 0.0
        %v1744 = vmax.f32 %v1384, 0.0
        %v1745 = vmax.f32 %v1386, 0.0
        %v1746 = vmax.f32 %v1437, 0.0
        %v1747 = vmax.f32 %v1439, 0.0
        %v1748 = vmax.f32 %v1490, 0.0
        %v1749 = vmax.f32 %v1492, 0.0
        %v1750 = vmax.f32 %v1543, 0.0
        %v1751 = vmax.f32 %v1545, 0.0
        %v1752 = vmax.f32 %v1596, 0.0
        %v1753 = vmax.f32 %v1598, 0.0
        %v1754 = vmax.f32 %v1649, 0.0
        %v1755 = vmax.f32 %v1651, 0.0
        %v1756 = vmax.f32 %v1702, 0.0
        %v1757 = vmax.f32 %v1704, 0.0
        %v1758 = vmax.f32 %v1335, 0.0
        %v1759 = vmax.f32 %v1337, 0.0
        %v1760 = vmax.f32 %v1388, 0.0
        %v1761 = vmax.f32 %v1390, 0.0
        %v1762 = vmax.f32 %v1441, 0.0
        %v1763 = vmax.f32 %v1443, 0.0
        %v1764 = vmax.f32 %v1494, 0.0
        %v1765 = vmax.f32 %v1496, 0.0
        %v1766 = vmax.f32 %v1547, 0.0
        %v1767 = vmax.f32 %v1549, 0.0
        %v1768 = vmax.f32 %v1600, 0.0
        %v1769 = vmax.f32 %v1602, 0.0
        %v1770 = vmax.f32 %v1653, 0.0
        %v1771 = vmax.f32 %v1655, 0.0
        %v1772 = vmax.f32 %v1706, 0.0
        %v1773 = vmax.f32 %v1708, 0.0
        %s1774 = sadd.s32 %s26, %s27
        %s1775 = smul.u32 %s1774, 32
        %s1776 = sadd.s32 %s1775, 32
        %p1777 = scmp.gt.s32.totalorder %s1776, 49
        %p1778 = scmp.le.s32.totalorder %s1776, 49
        // Predicated region
        $region49: #{tpu_custom_call.1} parent=39 // pred_check
          %p1779 = pneg %p1778
        $region50: #{tpu_custom_call.1} parent=39 // pred_check_branch
          %1781 = sbr.rel (%p1779) target = $region52
        $region51: #{tpu_custom_call.1} parent=39 // pred_region
          %v1782 = vld [vmem:[#allocation3] sm:$0xff]
          %v1783 = vld [vmem:[#allocation3 + $0x8] sm:$0xff]
          %v1784 = vadd.f32 %v1710, %v1726
          %v1785 = vadd.f32 %v1784, %v1742
          %v1786 = vadd.f32 %v1785, %v1758
          %v1787 = vrot.slane %v1786, 4
          %v1788 = vadd.f32 %v1786, %v1787
          %v1789 = vrot.slane %v1788, 2
          %v1790 = vadd.f32 %v1788, %v1789
          %v1791 = vrot.slane %v1790, 1
          %v1792 = vadd.f32 %v1790, %v1791
          %v1793 = vadd.f32 %v1711, %v1727
          %v1794 = vadd.f32 %v1793, %v1743
          %v1795 = vadd.f32 %v1794, %v1759
          %v1796 = vrot.slane %v1795, 4
          %v1797 = vadd.f32 %v1795, %v1796
          %v1798 = vrot.slane %v1797, 2
          %v1799 = vadd.f32 %v1797, %v1798
          %v1800 = vrot.slane %v1799, 1
          %v1801 = vadd.f32 %v1799, %v1800
          %v1802 = vadd.f32 %v1712, %v1728
          %v1803 = vadd.f32 %v1802, %v1744
          %v1804 = vadd.f32 %v1803, %v1760
          %v1805 = vrot.slane %v1804, 4
          %v1806 = vadd.f32 %v1804, %v1805
          %v1807 = vrot.slane %v1806, 2
          %v1808 = vadd.f32 %v1806, %v1807
          %v1809 = vrot.slane %v1808, 1
          %v1810 = vadd.f32 %v1808, %v1809
          %v1811 = vadd.f32 %v1713, %v1729
          %v1812 = vadd.f32 %v1811, %v1745
          %v1813 = vadd.f32 %v1812, %v1761
          %v1814 = vrot.slane %v1813, 4
          %v1815 = vadd.f32 %v1813, %v1814
          %v1816 = vrot.slane %v1815, 2
          %v1817 = vadd.f32 %v1815, %v1816
          %v1818 = vrot.slane %v1817, 1
          %v1819 = vadd.f32 %v1817, %v1818
          %v1820 = vadd.f32 %v1714, %v1730
          %v1821 = vadd.f32 %v1820, %v1746
          %v1822 = vadd.f32 %v1821, %v1762
          %v1823 = vrot.slane %v1822, 4
          %v1824 = vadd.f32 %v1822, %v1823
          %v1825 = vrot.slane %v1824, 2
          %v1826 = vadd.f32 %v1824, %v1825
          %v1827 = vrot.slane %v1826, 1
          %v1828 = vadd.f32 %v1826, %v1827
          %v1829 = vadd.f32 %v1715, %v1731
          %v1830 = vadd.f32 %v1829, %v1747
          %v1831 = vadd.f32 %v1830, %v1763
          %v1832 = vrot.slane %v1831, 4
          %v1833 = vadd.f32 %v1831, %v1832
          %v1834 = vrot.slane %v1833, 2
          %v1835 = vadd.f32 %v1833, %v1834
          %v1836 = vrot.slane %v1835, 1
          %v1837 = vadd.f32 %v1835, %v1836
          %v1838 = vadd.f32 %v1716, %v1732
          %v1839 = vadd.f32 %v1838, %v1748
          %v1840 = vadd.f32 %v1839, %v1764
          %v1841 = vrot.slane %v1840, 4
          %v1842 = vadd.f32 %v1840, %v1841
          %v1843 = vrot.slane %v1842, 2
          %v1844 = vadd.f32 %v1842, %v1843
          %v1845 = vrot.slane %v1844, 1
          %v1846 = vadd.f32 %v1844, %v1845
          %v1847 = vadd.f32 %v1717, %v1733
          %v1848 = vadd.f32 %v1847, %v1749
          %v1849 = vadd.f32 %v1848, %v1765
          %v1850 = vrot.slane %v1849, 4
          %v1851 = vadd.f32 %v1849, %v1850
          %v1852 = vrot.slane %v1851, 2
          %v1853 = vadd.f32 %v1851, %v1852
          %v1854 = vrot.slane %v1853, 1
          %v1855 = vadd.f32 %v1853, %v1854
          %v1856 = vadd.f32 %v1718, %v1734
          %v1857 = vadd.f32 %v1856, %v1750
          %v1858 = vadd.f32 %v1857, %v1766
          %v1859 = vrot.slane %v1858, 4
          %v1860 = vadd.f32 %v1858, %v1859
          %v1861 = vrot.slane %v1860, 2
          %v1862 = vadd.f32 %v1860, %v1861
          %v1863 = vrot.slane %v1862, 1
          %v1864 = vadd.f32 %v1862, %v1863
          %v1865 = vadd.f32 %v1719, %v1735
          %v1866 = vadd.f32 %v1865, %v1751
          %v1867 = vadd.f32 %v1866, %v1767
          %v1868 = vrot.slane %v1867, 4
          %v1869 = vadd.f32 %v1867, %v1868
          %v1870 = vrot.slane %v1869, 2
          %v1871 = vadd.f32 %v1869, %v1870
          %v1872 = vrot.slane %v1871, 1
          %v1873 = vadd.f32 %v1871, %v1872
          %v1874 = vadd.f32 %v1720, %v1736
          %v1875 = vadd.f32 %v1874, %v1752
          %v1876 = vadd.f32 %v1875, %v1768
          %v1877 = vrot.slane %v1876, 4
          %v1878 = vadd.f32 %v1876, %v1877
          %v1879 = vrot.slane %v1878, 2
          %v1880 = vadd.f32 %v1878, %v1879
          %v1881 = vrot.slane %v1880, 1
          %v1882 = vadd.f32 %v1880, %v1881
          %v1883 = vadd.f32 %v1721, %v1737
          %v1884 = vadd.f32 %v1883, %v1753
          %v1885 = vadd.f32 %v1884, %v1769
          %v1886 = vrot.slane %v1885, 4
          %v1887 = vadd.f32 %v1885, %v1886
          %v1888 = vrot.slane %v1887, 2
          %v1889 = vadd.f32 %v1887, %v1888
          %v1890 = vrot.slane %v1889, 1
          %v1891 = vadd.f32 %v1889, %v1890
          %v1892 = vadd.f32 %v1722, %v1738
          %v1893 = vadd.f32 %v1892, %v1754
          %v1894 = vadd.f32 %v1893, %v1770
          %v1895 = vrot.slane %v1894, 4
          %v1896 = vadd.f32 %v1894, %v1895
          %v1897 = vrot.slane %v1896, 2
          %v1898 = vadd.f32 %v1896, %v1897
          %v1899 = vrot.slane %v1898, 1
          %v1900 = vadd.f32 %v1898, %v1899
          %v1901 = vadd.f32 %v1723, %v1739
          %v1902 = vadd.f32 %v1901, %v1755
          %v1903 = vadd.f32 %v1902, %v1771
          %v1904 = vrot.slane %v1903, 4
          %v1905 = vadd.f32 %v1903, %v1904
          %v1906 = vrot.slane %v1905, 2
          %v1907 = vadd.f32 %v1905, %v1906
          %v1908 = vrot.slane %v1907, 1
          %v1909 = vadd.f32 %v1907, %v1908
          %v1910 = vadd.f32 %v1724, %v1740
          %v1911 = vadd.f32 %v1910, %v1756
          %v1912 = vadd.f32 %v1911, %v1772
          %v1913 = vrot.slane %v1912, 4
          %v1914 = vadd.f32 %v1912, %v1913
          %v1915 = vrot.slane %v1914, 2
          %v1916 = vadd.f32 %v1914, %v1915
          %v1917 = vrot.slane %v1916, 1
          %v1918 = vadd.f32 %v1916, %v1917
          %v1919 = vadd.f32 %v1725, %v1741
          %v1920 = vadd.f32 %v1919, %v1757
          %v1921 = vadd.f32 %v1920, %v1773
          %v1922 = vrot.slane %v1921, 4
          %v1923 = vadd.f32 %v1921, %v1922
          %v1924 = vrot.slane %v1923, 2
          %v1925 = vadd.f32 %v1923, %v1924
          %v1926 = vrot.slane %v1925, 1
          %v1927 = vadd.f32 %v1925, %v1926
          %v1944 = vcombine.low %v1792, %v1801
          %v1945 = vcombine.low %v1810, %v1819
          %v1946 = vcombine.low %v1828, %v1837
          %v1947 = vcombine.low %v1846, %v1855
          %v1949 = vunpack.c.l.s4 1966171168
          %v1950 = vunpack.c.0.s8 %v1949
          %v1951 = vlaneseq
          %v1952 = vshrl.u32 %v1951, 7
          %v1953 = vsub.s32 %v1950, %v1952
          %v1954 = vrot.slane %v1944, %v1953
          %v1956 = vunpack.c.l.s4 1966171168
          %v1957 = vunpack.c.0.s8 %v1956
          %v1958 = vlaneseq
          %v1959 = vshrl.u32 %v1958, 7
          %v1960 = vsub.s32 %v1957, %v1959
          %v1961 = vrot.slane %v1945, %v1960
          %v1963 = vunpack.c.l.s4 1966171168
          %v1964 = vunpack.c.0.s8 %v1963
          %v1965 = vlaneseq
          %v1966 = vshrl.u32 %v1965, 7
          %v1967 = vsub.s32 %v1964, %v1966
          %v1968 = vrot.slane %v1946, %v1967
          %v1970 = vunpack.c.l.s4 1966171168
          %v1971 = vunpack.c.0.s8 %v1970
          %v1972 = vlaneseq
          %v1973 = vshrl.u32 %v1972, 7
          %v1974 = vsub.s32 %v1971, %v1973
          %v1975 = vrot.slane %v1947, %v1974
          %v1976 = vcombine.low %v1954, %v1961
          %v1977 = vcombine.low %v1968, %v1975
          %v1979 = vunpack.c.l.s4 1966171168
          %v1980 = vunpack.c.0.s8 %v1979
          %v1981 = vlaneseq
          %v1982 = vshrl.u32 %v1981, 7
          %v1983 = vsub.s32 %v1980, %v1982
          %v1984 = vrot.slane %v1976, %v1983
          %v1986 = vunpack.c.l.s4 1966171168
          %v1987 = vunpack.c.0.s8 %v1986
          %v1988 = vlaneseq
          %v1989 = vshrl.u32 %v1988, 7
          %v1990 = vsub.s32 %v1987, %v1989
          %v1991 = vrot.slane %v1977, %v1990
          %v1992 = vcombine.low %v1984, %v1991
          %v1993 = vcombine.low %v1864, %v1873
          %v1994 = vcombine.low %v1882, %v1891
          %v1995 = vcombine.low %v1900, %v1909
          %v1996 = vcombine.low %v1918, %v1927
          %v1998 = vunpack.c.l.s4 1966171168
          %v1999 = vunpack.c.0.s8 %v1998
          %v2000 = vlaneseq
          %v2001 = vshrl.u32 %v2000, 7
          %v2002 = vsub.s32 %v1999, %v2001
          %v2003 = vrot.slane %v1993, %v2002
          %v2005 = vunpack.c.l.s4 1966171168
          %v2006 = vunpack.c.0.s8 %v2005
          %v2007 = vlaneseq
          %v2008 = vshrl.u32 %v2007, 7
          %v2009 = vsub.s32 %v2006, %v2008
          %v2010 = vrot.slane %v1994, %v2009
          %v2012 = vunpack.c.l.s4 1966171168
          %v2013 = vunpack.c.0.s8 %v2012
          %v2014 = vlaneseq
          %v2015 = vshrl.u32 %v2014, 7
          %v2016 = vsub.s32 %v2013, %v2015
          %v2017 = vrot.slane %v1995, %v2016
          %v2019 = vunpack.c.l.s4 1966171168
          %v2020 = vunpack.c.0.s8 %v2019
          %v2021 = vlaneseq
          %v2022 = vshrl.u32 %v2021, 7
          %v2023 = vsub.s32 %v2020, %v2022
          %v2024 = vrot.slane %v1996, %v2023
          %v2025 = vcombine.low %v2003, %v2010
          %v2026 = vcombine.low %v2017, %v2024
          %v2028 = vunpack.c.l.s4 1966171168
          %v2029 = vunpack.c.0.s8 %v2028
          %v2030 = vlaneseq
          %v2031 = vshrl.u32 %v2030, 7
          %v2032 = vsub.s32 %v2029, %v2031
          %v2033 = vrot.slane %v2025, %v2032
          %v2035 = vunpack.c.l.s4 1966171168
          %v2036 = vunpack.c.0.s8 %v2035
          %v2037 = vlaneseq
          %v2038 = vshrl.u32 %v2037, 7
          %v2039 = vsub.s32 %v2036, %v2038
          %v2040 = vrot.slane %v2026, %v2039
          %v2041 = vcombine.low %v2033, %v2040
          %v2044 = vadd.f32 %v1782, %v1992
          %v2045 = vadd.f32 %v1783, %v2041
          %2046 = vst [vmem:[#allocation3] sm:$0xff] %v2044
          %2047 = vst [vmem:[#allocation3 + $0x8] sm:$0xff] %v2045
        $region52: #{tpu_custom_call.1} parent=39 // pred_fallthru
          _
        // Predicated region
        $region53: #{tpu_custom_call.1} parent=39 // pred_check
          %p2048 = pneg %p1777
        $region54: #{tpu_custom_call.1} parent=39 // pred_check_branch
          %2050 = sbr.rel (%p2048) target = $region56
        $region55: #{tpu_custom_call.1} parent=39 // pred_region
          %v2051 = vlaneseq
          %v2052 = vshrl.u32 %v2051, 7
          %v2053 = vadd.s32 %v2052, 8
          %v2054 = vadd.s32 %v2052, 16
          %v2055 = vadd.s32 %v2052, 24
          %v2056 = vstv %s1775
          %v2057 = vadd.s32 %v2052, %v2056
          %v2058 = vadd.s32 %v2053, %v2056
          %v2059 = vadd.s32 %v2054, %v2056
          %v2060 = vadd.s32 %v2055, %v2056
          %vm2061 = vcmp.lt.s32.totalorder %v2057, 49
          %vm2062 = vcmp.lt.s32.totalorder %v2058, 49
          %vm2063 = vcmp.lt.s32.totalorder %v2059, 49
          %vm2064 = vcmp.lt.s32.totalorder %v2060, 49
          %v2065 = vsel %vm2061, 1, 0
          %v2066 = vsel %vm2062, 1, 0
          %v2067 = vsel %vm2063, 1, 0
          %v2068 = vsel %vm2064, 1, 0
          %v2069 = vcvt.s32.f32 %v2065
          %v2070 = vcvt.s32.f32 %v2066
          %v2071 = vcvt.s32.f32 %v2067
          %v2072 = vcvt.s32.f32 %v2068
          %v2073 = vld [vmem:[#allocation3] sm:$0xff]
          %v2074 = vld [vmem:[#allocation3 + $0x8] sm:$0xff]
          %v2075 = vmul.f32 %v1710, %v2069
          %v2076 = vmul.f32 %v1711, %v2069
          %v2077 = vmul.f32 %v1712, %v2069
          %v2078 = vmul.f32 %v1713, %v2069
          %v2079 = vmul.f32 %v1714, %v2069
          %v2080 = vmul.f32 %v1715, %v2069
          %v2081 = vmul.f32 %v1716, %v2069
          %v2082 = vmul.f32 %v1717, %v2069
          %v2083 = vmul.f32 %v1718, %v2069
          %v2084 = vmul.f32 %v1719, %v2069
          %v2085 = vmul.f32 %v1720, %v2069
          %v2086 = vmul.f32 %v1721, %v2069
          %v2087 = vmul.f32 %v1722, %v2069
          %v2088 = vmul.f32 %v1723, %v2069
          %v2089 = vmul.f32 %v1724, %v2069
          %v2090 = vmul.f32 %v1725, %v2069
          %v2091 = vmul.f32 %v1726, %v2070
          %v2092 = vmul.f32 %v1727, %v2070
          %v2093 = vmul.f32 %v1728, %v2070
          %v2094 = vmul.f32 %v1729, %v2070
          %v2095 = vmul.f32 %v1730, %v2070
          %v2096 = vmul.f32 %v1731, %v2070
          %v2097 = vmul.f32 %v1732, %v2070
          %v2098 = vmul.f32 %v1733, %v2070
          %v2099 = vmul.f32 %v1734, %v2070
          %v2100 = vmul.f32 %v1735, %v2070
          %v2101 = vmul.f32 %v1736, %v2070
          %v2102 = vmul.f32 %v1737, %v2070
          %v2103 = vmul.f32 %v1738, %v2070
          %v2104 = vmul.f32 %v1739, %v2070
          %v2105 = vmul.f32 %v1740, %v2070
          %v2106 = vmul.f32 %v1741, %v2070
          %v2107 = vmul.f32 %v1742, %v2071
          %v2108 = vmul.f32 %v1743, %v2071
          %v2109 = vmul.f32 %v1744, %v2071
          %v2110 = vmul.f32 %v1745, %v2071
          %v2111 = vmul.f32 %v1746, %v2071
          %v2112 = vmul.f32 %v1747, %v2071
          %v2113 = vmul.f32 %v1748, %v2071
          %v2114 = vmul.f32 %v1749, %v2071
          %v2115 = vmul.f32 %v1750, %v2071
          %v2116 = vmul.f32 %v1751, %v2071
          %v2117 = vmul.f32 %v1752, %v2071
          %v2118 = vmul.f32 %v1753, %v2071
          %v2119 = vmul.f32 %v1754, %v2071
          %v2120 = vmul.f32 %v1755, %v2071
          %v2121 = vmul.f32 %v1756, %v2071
          %v2122 = vmul.f32 %v1757, %v2071
          %v2123 = vmul.f32 %v1758, %v2072
          %v2124 = vmul.f32 %v1759, %v2072
          %v2125 = vmul.f32 %v1760, %v2072
          %v2126 = vmul.f32 %v1761, %v2072
          %v2127 = vmul.f32 %v1762, %v2072
          %v2128 = vmul.f32 %v1763, %v2072
          %v2129 = vmul.f32 %v1764, %v2072
          %v2130 = vmul.f32 %v1765, %v2072
          %v2131 = vmul.f32 %v1766, %v2072
          %v2132 = vmul.f32 %v1767, %v2072
          %v2133 = vmul.f32 %v1768, %v2072
          %v2134 = vmul.f32 %v1769, %v2072
          %v2135 = vmul.f32 %v1770, %v2072
          %v2136 = vmul.f32 %v1771, %v2072
          %v2137 = vmul.f32 %v1772, %v2072
          %v2138 = vmul.f32 %v1773, %v2072
          %v2139 = vadd.f32 %v2075, %v2091
          %v2140 = vadd.f32 %v2139, %v2107
          %v2141 = vadd.f32 %v2140, %v2123
          %v2142 = vrot.slane %v2141, 4
          %v2143 = vadd.f32 %v2141, %v2142
          %v2144 = vrot.slane %v2143, 2
          %v2145 = vadd.f32 %v2143, %v2144
          %v2146 = vrot.slane %v2145, 1
          %v2147 = vadd.f32 %v2145, %v2146
          %v2148 = vadd.f32 %v2076, %v2092
          %v2149 = vadd.f32 %v2148, %v2108
          %v2150 = vadd.f32 %v2149, %v2124
          %v2151 = vrot.slane %v2150, 4
          %v2152 = vadd.f32 %v2150, %v2151
          %v2153 = vrot.slane %v2152, 2
          %v2154 = vadd.f32 %v2152, %v2153
          %v2155 = vrot.slane %v2154, 1
          %v2156 = vadd.f32 %v2154, %v2155
          %v2157 = vadd.f32 %v2077, %v2093
          %v2158 = vadd.f32 %v2157, %v2109
          %v2159 = vadd.f32 %v2158, %v2125
          %v2160 = vrot.slane %v2159, 4
          %v2161 = vadd.f32 %v2159, %v2160
          %v2162 = vrot.slane %v2161, 2
          %v2163 = vadd.f32 %v2161, %v2162
          %v2164 = vrot.slane %v2163, 1
          %v2165 = vadd.f32 %v2163, %v2164
          %v2166 = vadd.f32 %v2078, %v2094
          %v2167 = vadd.f32 %v2166, %v2110
          %v2168 = vadd.f32 %v2167, %v2126
          %v2169 = vrot.slane %v2168, 4
          %v2170 = vadd.f32 %v2168, %v2169
          %v2171 = vrot.slane %v2170, 2
          %v2172 = vadd.f32 %v2170, %v2171
          %v2173 = vrot.slane %v2172, 1
          %v2174 = vadd.f32 %v2172, %v2173
          %v2175 = vadd.f32 %v2079, %v2095
          %v2176 = vadd.f32 %v2175, %v2111
          %v2177 = vadd.f32 %v2176, %v2127
          %v2178 = vrot.slane %v2177, 4
          %v2179 = vadd.f32 %v2177, %v2178
          %v2180 = vrot.slane %v2179, 2
          %v2181 = vadd.f32 %v2179, %v2180
          %v2182 = vrot.slane %v2181, 1
          %v2183 = vadd.f32 %v2181, %v2182
          %v2184 = vadd.f32 %v2080, %v2096
          %v2185 = vadd.f32 %v2184, %v2112
          %v2186 = vadd.f32 %v2185, %v2128
          %v2187 = vrot.slane %v2186, 4
          %v2188 = vadd.f32 %v2186, %v2187
          %v2189 = vrot.slane %v2188, 2
          %v2190 = vadd.f32 %v2188, %v2189
          %v2191 = vrot.slane %v2190, 1
          %v2192 = vadd.f32 %v2190, %v2191
          %v2193 = vadd.f32 %v2081, %v2097
          %v2194 = vadd.f32 %v2193, %v2113
          %v2195 = vadd.f32 %v2194, %v2129
          %v2196 = vrot.slane %v2195, 4
          %v2197 = vadd.f32 %v2195, %v2196
          %v2198 = vrot.slane %v2197, 2
          %v2199 = vadd.f32 %v2197, %v2198
          %v2200 = vrot.slane %v2199, 1
          %v2201 = vadd.f32 %v2199, %v2200
          %v2202 = vadd.f32 %v2082, %v2098
          %v2203 = vadd.f32 %v2202, %v2114
          %v2204 = vadd.f32 %v2203, %v2130
          %v2205 = vrot.slane %v2204, 4
          %v2206 = vadd.f32 %v2204, %v2205
          %v2207 = vrot.slane %v2206, 2
          %v2208 = vadd.f32 %v2206, %v2207
          %v2209 = vrot.slane %v2208, 1
          %v2210 = vadd.f32 %v2208, %v2209
          %v2211 = vadd.f32 %v2083, %v2099
          %v2212 = vadd.f32 %v2211, %v2115
          %v2213 = vadd.f32 %v2212, %v2131
          %v2214 = vrot.slane %v2213, 4
          %v2215 = vadd.f32 %v2213, %v2214
          %v2216 = vrot.slane %v2215, 2
          %v2217 = vadd.f32 %v2215, %v2216
          %v2218 = vrot.slane %v2217, 1
          %v2219 = vadd.f32 %v2217, %v2218
          %v2220 = vadd.f32 %v2084, %v2100
          %v2221 = vadd.f32 %v2220, %v2116
          %v2222 = vadd.f32 %v2221, %v2132
          %v2223 = vrot.slane %v2222, 4
          %v2224 = vadd.f32 %v2222, %v2223
          %v2225 = vrot.slane %v2224, 2
          %v2226 = vadd.f32 %v2224, %v2225
          %v2227 = vrot.slane %v2226, 1
          %v2228 = vadd.f32 %v2226, %v2227
          %v2229 = vadd.f32 %v2085, %v2101
          %v2230 = vadd.f32 %v2229, %v2117
          %v2231 = vadd.f32 %v2230, %v2133
          %v2232 = vrot.slane %v2231, 4
          %v2233 = vadd.f32 %v2231, %v2232
          %v2234 = vrot.slane %v2233, 2
          %v2235 = vadd.f32 %v2233, %v2234
          %v2236 = vrot.slane %v2235, 1
          %v2237 = vadd.f32 %v2235, %v2236
          %v2238 = vadd.f32 %v2086, %v2102
          %v2239 = vadd.f32 %v2238, %v2118
          %v2240 = vadd.f32 %v2239, %v2134
          %v2241 = vrot.slane %v2240, 4
          %v2242 = vadd.f32 %v2240, %v2241
          %v2243 = vrot.slane %v2242, 2
          %v2244 = vadd.f32 %v2242, %v2243
          %v2245 = vrot.slane %v2244, 1
          %v2246 = vadd.f32 %v2244, %v2245
          %v2247 = vadd.f32 %v2087, %v2103
          %v2248 = vadd.f32 %v2247, %v2119
          %v2249 = vadd.f32 %v2248, %v2135
          %v2250 = vrot.slane %v2249, 4
          %v2251 = vadd.f32 %v2249, %v2250
          %v2252 = vrot.slane %v2251, 2
          %v2253 = vadd.f32 %v2251, %v2252
          %v2254 = vrot.slane %v2253, 1
          %v2255 = vadd.f32 %v2253, %v2254
          %v2256 = vadd.f32 %v2088, %v2104
          %v2257 = vadd.f32 %v2256, %v2120
          %v2258 = vadd.f32 %v2257, %v2136
          %v2259 = vrot.slane %v2258, 4
          %v2260 = vadd.f32 %v2258, %v2259
          %v2261 = vrot.slane %v2260, 2
          %v2262 = vadd.f32 %v2260, %v2261
          %v2263 = vrot.slane %v2262, 1
          %v2264 = vadd.f32 %v2262, %v2263
          %v2265 = vadd.f32 %v2089, %v2105
          %v2266 = vadd.f32 %v2265, %v2121
          %v2267 = vadd.f32 %v2266, %v2137
          %v2268 = vrot.slane %v2267, 4
          %v2269 = vadd.f32 %v2267, %v2268
          %v2270 = vrot.slane %v2269, 2
          %v2271 = vadd.f32 %v2269, %v2270
          %v2272 = vrot.slane %v2271, 1
          %v2273 = vadd.f32 %v2271, %v2272
          %v2274 = vadd.f32 %v2090, %v2106
          %v2275 = vadd.f32 %v2274, %v2122
          %v2276 = vadd.f32 %v2275, %v2138
          %v2277 = vrot.slane %v2276, 4
          %v2278 = vadd.f32 %v2276, %v2277
          %v2279 = vrot.slane %v2278, 2
          %v2280 = vadd.f32 %v2278, %v2279
          %v2281 = vrot.slane %v2280, 1
          %v2282 = vadd.f32 %v2280, %v2281
          %v2299 = vcombine.low %v2147, %v2156
          %v2300 = vcombine.low %v2165, %v2174
          %v2301 = vcombine.low %v2183, %v2192
          %v2302 = vcombine.low %v2201, %v2210
          %v2304 = vunpack.c.l.s4 1966171168
          %v2305 = vunpack.c.0.s8 %v2304
          %v2306 = vlaneseq
          %v2307 = vshrl.u32 %v2306, 7
          %v2308 = vsub.s32 %v2305, %v2307
          %v2309 = vrot.slane %v2299, %v2308
          %v2311 = vunpack.c.l.s4 1966171168
          %v2312 = vunpack.c.0.s8 %v2311
          %v2313 = vlaneseq
          %v2314 = vshrl.u32 %v2313, 7
          %v2315 = vsub.s32 %v2312, %v2314
          %v2316 = vrot.slane %v2300, %v2315
          %v2318 = vunpack.c.l.s4 1966171168
          %v2319 = vunpack.c.0.s8 %v2318
          %v2320 = vlaneseq
          %v2321 = vshrl.u32 %v2320, 7
          %v2322 = vsub.s32 %v2319, %v2321
          %v2323 = vrot.slane %v2301, %v2322
          %v2325 = vunpack.c.l.s4 1966171168
          %v2326 = vunpack.c.0.s8 %v2325
          %v2327 = vlaneseq
          %v2328 = vshrl.u32 %v2327, 7
          %v2329 = vsub.s32 %v2326, %v2328
          %v2330 = vrot.slane %v2302, %v2329
          %v2331 = vcombine.low %v2309, %v2316
          %v2332 = vcombine.low %v2323, %v2330
          %v2334 = vunpack.c.l.s4 1966171168
          %v2335 = vunpack.c.0.s8 %v2334
          %v2336 = vlaneseq
          %v2337 = vshrl.u32 %v2336, 7
          %v2338 = vsub.s32 %v2335, %v2337
          %v2339 = vrot.slane %v2331, %v2338
          %v2341 = vunpack.c.l.s4 1966171168
          %v2342 = vunpack.c.0.s8 %v2341
          %v2343 = vlaneseq
          %v2344 = vshrl.u32 %v2343, 7
          %v2345 = vsub.s32 %v2342, %v2344
          %v2346 = vrot.slane %v2332, %v2345
          %v2347 = vcombine.low %v2339, %v2346
          %v2348 = vcombine.low %v2219, %v2228
          %v2349 = vcombine.low %v2237, %v2246
          %v2350 = vcombine.low %v2255, %v2264
          %v2351 = vcombine.low %v2273, %v2282
          %v2353 = vunpack.c.l.s4 1966171168
          %v2354 = vunpack.c.0.s8 %v2353
          %v2355 = vlaneseq
          %v2356 = vshrl.u32 %v2355, 7
          %v2357 = vsub.s32 %v2354, %v2356
          %v2358 = vrot.slane %v2348, %v2357
          %v2360 = vunpack.c.l.s4 1966171168
          %v2361 = vunpack.c.0.s8 %v2360
          %v2362 = vlaneseq
          %v2363 = vshrl.u32 %v2362, 7
          %v2364 = vsub.s32 %v2361, %v2363
          %v2365 = vrot.slane %v2349, %v2364
          %v2367 = vunpack.c.l.s4 1966171168
          %v2368 = vunpack.c.0.s8 %v2367
          %v2369 = vlaneseq
          %v2370 = vshrl.u32 %v2369, 7
          %v2371 = vsub.s32 %v2368, %v2370
          %v2372 = vrot.slane %v2350, %v2371
          %v2374 = vunpack.c.l.s4 1966171168
          %v2375 = vunpack.c.0.s8 %v2374
          %v2376 = vlaneseq
          %v2377 = vshrl.u32 %v2376, 7
          %v2378 = vsub.s32 %v2375, %v2377
          %v2379 = vrot.slane %v2351, %v2378
          %v2380 = vcombine.low %v2358, %v2365
          %v2381 = vcombine.low %v2372, %v2379
          %v2383 = vunpack.c.l.s4 1966171168
          %v2384 = vunpack.c.0.s8 %v2383
          %v2385 = vlaneseq
          %v2386 = vshrl.u32 %v2385, 7
          %v2387 = vsub.s32 %v2384, %v2386
          %v2388 = vrot.slane %v2380, %v2387
          %v2390 = vunpack.c.l.s4 1966171168
          %v2391 = vunpack.c.0.s8 %v2390
          %v2392 = vlaneseq
          %v2393 = vshrl.u32 %v2392, 7
          %v2394 = vsub.s32 %v2391, %v2393
          %v2395 = vrot.slane %v2381, %v2394
          %v2396 = vcombine.low %v2388, %v2395
          %v2399 = vadd.f32 %v2073, %v2347
          %v2400 = vadd.f32 %v2074, %v2396
          %2401 = vst [vmem:[#allocation3] sm:$0xff] %v2399
          %2402 = vst [vmem:[#allocation3 + $0x8] sm:$0xff] %v2400
        $region56: #{tpu_custom_call.1} parent=39 // pred_fallthru
          _
        // Predicated region
        $region57: #{tpu_custom_call.1} parent=39 // pred_check
          %p2403 = pneg %p283
        $region58: #{tpu_custom_call.1} parent=39 // pred_check_branch
          %2405 = sbr.rel (%p2403) target = $region60
        $region59: #{tpu_custom_call.1} parent=39 // pred_region
          %v2406 = vld [vmem:[#allocation3] sm:$0xff]
          %v2407 = vld [vmem:[#allocation3 + $0x8] sm:$0xff]
          %v2410 = vlaneseq
          %v2411 = vshrl.u32 %v2410, 7
          %v2412 = vsub.s32 0, %v2411
          %v2413 = vrot.slane %v2406, %v2412
          %v2414 = vlaneseq
          %v2415 = vshrl.u32 %v2414, 7
          %v2416 = vsub.s32 1, %v2415
          %v2417 = vrot.slane %v2406, %v2416
          %v2418 = vlaneseq
          %v2419 = vshrl.u32 %v2418, 7
          %v2420 = vsub.s32 2, %v2419
          %v2421 = vrot.slane %v2406, %v2420
          %v2422 = vlaneseq
          %v2423 = vshrl.u32 %v2422, 7
          %v2424 = vsub.s32 3, %v2423
          %v2425 = vrot.slane %v2406, %v2424
          %v2426 = vlaneseq
          %v2427 = vshrl.u32 %v2426, 7
          %v2428 = vsub.s32 4, %v2427
          %v2429 = vrot.slane %v2406, %v2428
          %v2430 = vlaneseq
          %v2431 = vshrl.u32 %v2430, 7
          %v2432 = vsub.s32 5, %v2431
          %v2433 = vrot.slane %v2406, %v2432
          %v2434 = vlaneseq
          %v2435 = vshrl.u32 %v2434, 7
          %v2436 = vsub.s32 6, %v2435
          %v2437 = vrot.slane %v2406, %v2436
          %v2438 = vlaneseq
          %v2439 = vshrl.u32 %v2438, 7
          %v2440 = vsub.s32 7, %v2439
          %v2441 = vrot.slane %v2406, %v2440
          %v2442 = vlaneseq
          %v2443 = vshrl.u32 %v2442, 7
          %v2444 = vsub.s32 0, %v2443
          %v2445 = vrot.slane %v2407, %v2444
          %v2446 = vlaneseq
          %v2447 = vshrl.u32 %v2446, 7
          %v2448 = vsub.s32 1, %v2447
          %v2449 = vrot.slane %v2407, %v2448
          %v2450 = vlaneseq
          %v2451 = vshrl.u32 %v2450, 7
          %v2452 = vsub.s32 2, %v2451
          %v2453 = vrot.slane %v2407, %v2452
          %v2454 = vlaneseq
          %v2455 = vshrl.u32 %v2454, 7
          %v2456 = vsub.s32 3, %v2455
          %v2457 = vrot.slane %v2407, %v2456
          %v2458 = vlaneseq
          %v2459 = vshrl.u32 %v2458, 7
          %v2460 = vsub.s32 4, %v2459
          %v2461 = vrot.slane %v2407, %v2460
          %v2462 = vlaneseq
          %v2463 = vshrl.u32 %v2462, 7
          %v2464 = vsub.s32 5, %v2463
          %v2465 = vrot.slane %v2407, %v2464
          %v2466 = vlaneseq
          %v2467 = vshrl.u32 %v2466, 7
          %v2468 = vsub.s32 6, %v2467
          %v2469 = vrot.slane %v2407, %v2468
          %v2470 = vlaneseq
          %v2471 = vshrl.u32 %v2470, 7
          %v2472 = vsub.s32 7, %v2471
          %v2473 = vrot.slane %v2407, %v2472
          %2490 = vst [vmem:[%s269] sm:$0xff] %v2413
          %2491 = vst [vmem:[%s269 + $0x8] sm:$0xff] %v2417
          %2492 = vst [vmem:[%s269 + $0x10] sm:$0xff] %v2421
          %2493 = vst [vmem:[%s269 + $0x18] sm:$0xff] %v2425
          %2494 = vst [vmem:[%s269 + $0x20] sm:$0xff] %v2429
          %2495 = vst [vmem:[%s269 + $0x28] sm:$0xff] %v2433
          %2496 = vst [vmem:[%s269 + $0x30] sm:$0xff] %v2437
          %2497 = vst [vmem:[%s269 + $0x38] sm:$0xff] %v2441
          %2498 = vst [vmem:[%s269 + $0x40] sm:$0xff] %v2445
          %2499 = vst [vmem:[%s269 + $0x48] sm:$0xff] %v2449
          %2500 = vst [vmem:[%s269 + $0x50] sm:$0xff] %v2453
          %2501 = vst [vmem:[%s269 + $0x58] sm:$0xff] %v2457
          %2502 = vst [vmem:[%s269 + $0x60] sm:$0xff] %v2461
          %2503 = vst [vmem:[%s269 + $0x68] sm:$0xff] %v2465
          %2504 = vst [vmem:[%s269 + $0x70] sm:$0xff] %v2469
          %2505 = vst [vmem:[%s269 + $0x78] sm:$0xff] %v2473
        $region60: #{tpu_custom_call.1} parent=39 // pred_fallthru
          _
        %s2506 = sand.u32 %s163, 1
        %s2507 = scalar_lea.sflag [#allocation6], %s2506
        %s2508 = sand.u32 %s163, 1
        %s2509 = smul.addr %s2508, 128
        %s2510 = scalar_lea.vmem [#allocation7], %s2509
        // Predicated region
        $region61: #{tpu_custom_call.1} parent=39 // pred_check
          %p2511 = pneg %p173
        $region62: #{tpu_custom_call.1} parent=39 // pred_check_branch
          %2513 = sbr.rel (%p2511) target = $region64
        $region63: #{tpu_custom_call.1} parent=39 // pred_region
          %s2515 = ssub.s32 2048, 2048
          %2516 = vsyncadd %s2507, %s2515
          %s2517 = smul.addr %s26, 16
          %s2518 = smul.addr %s25, 32
          %s2519 = sadd.s32 %s2517, %s2518
          %s2520 = smul.addr %s2519, 128
          %s2521 = scalar_lea.hbm %s5, %s2520
          %s2523 = sshll.u32 %s2510, 4
          %s2524 = int_to_ptr.vmem [resolvable:$true] %s2523
          %2526 = dma.vmem_to_hbm [thread:$0]  %s2524, 2048, %s2521, %s2507
        $region64: #{tpu_custom_call.1} parent=39 // pred_fallthru
          _
      $region40: #{tpu_custom_call.1} parent=5 // pred_fallthru
        _
      %p2527 = scmp.le.s32.totalorder 2, %s15
      // Predicated region
      $region65: #{tpu_custom_call.1} parent=5 // pred_check
        %p2528 = pneg %p2527
      $region66: #{tpu_custom_call.1} parent=5 // pred_check_branch
        %2530 = sbr.rel (%p2528) target = $region68
      $region67: #{tpu_custom_call.1} parent=5 // pred_region
        %s2531 = ssub.s32 %s15, 2
        // Predicated region
        $region69: #{tpu_custom_call.1} parent=67 // pred_check
          %p2532 = pneg %p179
        $region70: #{tpu_custom_call.1} parent=67 // pred_check_branch
          %2534 = sbr.rel (%p2532) target = $region72
        $region71: #{tpu_custom_call.1} parent=67 // pred_region
          %s2535 = sand.u32 %s164, 1
          %s2536 = scalar_lea.sflag [#allocation6], %s2535
          %s2537 = sand.u32 %s164, 1
          %s2538 = smul.addr %s2537, 128
          %s2539 = scalar_lea.vmem [#allocation7], %s2538
          %2540 = dma.done %s2536, 2048
        $region72: #{tpu_custom_call.1} parent=67 // pred_fallthru
          _
      $region68: #{tpu_custom_call.1} parent=5 // pred_fallthru
        _
    $region6: #{tpu_custom_call.1} parent=1 // loop_footer
      %s19 = sadd.s32 1, %s15
    $region7: #{tpu_custom_call.1} parent=1 // loop_footer_branch
      %14 = sbr.rel target = $region3
    $region8: #{tpu_custom_call.1} parent=1 // loop_exit
      _
    %2541 = vsyncpa [#allocation5], 1
    %s2542 = scalar_lea.sflag [#allocation5], 1
    %2543 = vsyncpa %s2542, 1
    %2544 = vsyncpa [#allocation6], 1
    %s2545 = scalar_lea.sflag [#allocation6], 1
    %2546 = vsyncpa %s2545, 1

</llo_original>
